<compile_context>
chip_gen: v7x
topology: tpu7x:2x2x1
jax: 0.10.0
libtpu: 0.0.40
codegen_flags: <defaults>
</compile_context>

<pallas_src>
import functools

import jax
import jax.numpy as jnp
from jax.experimental import pallas as pl
from jax.experimental.pallas import tpu as pltpu

EPS = 1e-5


def _round_up(v, m):
    return (v + m - 1) // m * m


def _double_conv_kernel(x_ref, mask_ref, w1_ref, g1_ref, be1_ref,
                        w2_ref, g2_ref, be2_ref, o_ref, patch_ref,
                        *, Wp, n_valid, mxu_dtype):
    """Channel-major flattened layout.

    x_ref    : (Cin_p, Mp)  f32   zero-padded input; flat (n, y_pad, x_pad) on lanes.
    mask_ref : (1, Mp)      f32   1.0 at interior (valid output) columns, else 0.
    wX_ref   : (CoutX_p, 9*CinX_p) mxu_dtype  im2col weights, taps on the K rows.
    gX/beX   : (CoutX_p, 1) f32   BN affine params (column vectors).
    o_ref    : (Cout_p, Mp) f32   lane-dense output slab.
    patch_ref: (9*Cmax_p, Mp) mxu_dtype  shared im2col scratch (both convs).
    """
    Mp = x_ref.shape[1]
    mask = mask_ref[...]                                   # (1, Mp) f32
    inv_m = 1.0 / n_valid

    def conv3x3(src, cin, w_ref):
        # Tap t=(dy,dx) needs shifted[:, p] == src[:, p + (dy-1)*Wp + (dx-1)].
        # Lane shift via one XLU roll (f32), then one sublane-offset store
        # (cast once to the MXU dtype at the store).  One big-K MXU matmul.
        for t, (dy, dx) in enumerate((dy, dx) for dy in range(3) for dx in range(3)):
            off = (dy - 1) * Wp + (dx - 1)
            shifted = pltpu.roll(src, shift=(-off) % Mp, axis=1) if off != 0 else src
            patch_ref[t * cin:(t + 1) * cin, :] = shifted.astype(mxu_dtype)
        return jnp.dot(w_ref[...], patch_ref[0:9 * cin, :],
                       preferred_element_type=jnp.float32)  # (cout, Mp) f32

    def bn_relu(h, g_ref, be_ref):
        # Train-mode BatchNorm2d with single-pass masked batch statistics (f32).
        hm = h * mask                                       # zero outside interior
        s = jnp.sum(hm, axis=1, keepdims=True)              # (C, 1)
        ss = jnp.sum(hm * h, axis=1, keepdims=True)         # (C, 1)
        mu = s * inv_m
        var = jnp.maximum(ss * inv_m - mu * mu, 0.0)        # clamp cancellation
        scale = g_ref[...] * jax.lax.rsqrt(var + EPS)       # (C, 1)
        shift = be_ref[...] - mu * scale                    # (C, 1)
        # The trailing mask re-zeroes the 1-px ring -> conv2 sees proper zero pad.
        return jnp.maximum(h * scale + shift, 0.0) * mask

    cin = x_ref.shape[0]
    cmid = g1_ref.shape[0]

    y1 = bn_relu(conv3x3(x_ref[...], cin, w1_ref), g1_ref, be1_ref)   # (Cmid_p, Mp)
    y2 = bn_relu(conv3x3(y1, cmid, w2_ref), g2_ref, be2_ref)          # (Cout_p, Mp)
    o_ref[...] = y2


def double_conv_pallas(x_nchw, params, *, mxu_dtype=jnp.bfloat16):
    """Fused (conv3x3 -> train-mode BN -> ReLU) x 2.

    x_nchw: (N, C_in, H, W) float32; returns (N, C_out, H, W) float32.
    mxu_dtype defaults to bfloat16 (MXU-native on v5e/v6e/v7x); BN/elementwise
    math stays f32.  Pass jnp.float32 for bit-faithful matmul accumulation.
    """
    w1, b1, g1, be1, w2, b2, g2, be2 = params
    del b1, b2  # exactly cancelled by the train-mode BN mean subtraction
    N, Cin, H, W = x_nchw.shape
    Cmid, Cout = w1.shape[-1], w2.shape[-1]

    Cin_p, Cmid_p, Cout_p = (_round_up(c, 8) for c in (Cin, Cmid, Cout))
    Cmax_p = max(Cin_p, Cmid_p)
    Hp, Wp = H + 2, W + 2
    Mp = N * Hp * Wp
    Mp_pad = max(_round_up(Mp, 128), 128)

    # NCHW -> channel-major flat (C_p, N*Hp*Wp_pad): channels on sublanes,
    # zero-padded flat spatial on lanes (lane dim is a multiple of 128).
    xc = jnp.transpose(x_nchw, (1, 0, 2, 3)).astype(jnp.float32)       # (Cin,N,H,W)
    xc = jnp.pad(xc, ((0, Cin_p - Cin), (0, 0), (1, 1), (1, 1)))        # (Cin_p,N,Hp,Wp)
    xf = jnp.pad(xc.reshape(Cin_p, Mp), ((0, 0), (0, Mp_pad - Mp)))

    # Interior mask: 1.0 at valid output pixels, 0.0 on the pad ring / flat tail.
    m = jnp.zeros((N, Hp, Wp), jnp.float32).at[:, 1:H + 1, 1:W + 1].set(1.0)
    mask = jnp.pad(m.reshape(1, Mp), ((0, 0), (0, Mp_pad - Mp)))

    # HWIO weights -> (C_out_p, 9*C_in_p) with tap t = dy*3+dx blocks along K.
    def conv_w(w, cin, cin_p, cout, cout_p):
        wp = jnp.pad(w, ((0, 0), (0, 0), (0, cin_p - cin), (0, cout_p - cout)))
        return jnp.transpose(wp, (3, 0, 1, 2)).reshape(cout_p, 9 * cin_p).astype(mxu_dtype)

    w1m = conv_w(w1, Cin, Cin_p, Cmid, Cmid_p)
    w2m = conv_w(w2, Cmid, Cmid_p, Cout, Cout_p)

    def col(p, cp):
        return jnp.pad(p, (0, cp - p.shape[0])).reshape(cp, 1).astype(jnp.float32)

    g1c, be1c = col(g1, Cmid_p), col(be1, Cmid_p)
    g2c, be2c = col(g2, Cout_p), col(be2, Cout_p)

    kernel = functools.partial(_double_conv_kernel, Wp=Wp, n_valid=N * H * W,
                               mxu_dtype=mxu_dtype)

    def spec2d(shape):
        return pl.BlockSpec(shape, lambda i: (0, 0))

    # VMEM budget from Mosaic-tiled shapes (lane dim -> 128, sublane -> 8/16/32),
    # x2 for BlockSpec double-buffering of inputs/outputs; clamp under v7x 64 MiB.
    def tiled_bytes(shape, dtype):
        r, c = shape
        b = jnp.dtype(dtype).itemsize
        sub = 8 * (4 // b)
        return _round_up(r, sub) * _round_up(c, 128) * b

    io_bytes = (tiled_bytes((Cin_p, Mp_pad), jnp.float32)
                + tiled_bytes((1, Mp_pad), jnp.float32)
                + tiled_bytes((Cmid_p, 9 * Cin_p), mxu_dtype)
                + tiled_bytes((Cout_p, 9 * Cmid_p), mxu_dtype)
                + 2 * tiled_bytes((Cmid_p, 1), jnp.float32)
                + 2 * tiled_bytes((Cout_p, 1), jnp.float32)
                + tiled_bytes((Cout_p, Mp_pad), jnp.float32))
    scratch_bytes = tiled_bytes((9 * Cmax_p, Mp_pad), mxu_dtype)
    live_bytes = 4 * tiled_bytes((Cmax_p, Mp_pad), jnp.float32)      # h/y temporaries
    vmem_est = 2 * io_bytes + scratch_bytes + live_bytes
    vmem_limit = int(min(40 * 2**20, max(16 * 2**20, 2 * vmem_est)))

    out = pl.pallas_call(
        kernel,
        out_shape=jax.ShapeDtypeStruct((Cout_p, Mp_pad), jnp.float32),
        grid=(1,),
        in_specs=[
            spec2d((Cin_p, Mp_pad)),
            spec2d((1, Mp_pad)),
            spec2d((Cmid_p, 9 * Cin_p)),
            spec2d((Cmid_p, 1)),
            spec2d((Cmid_p, 1)),
            spec2d((Cout_p, 9 * Cmid_p)),
            spec2d((Cout_p, 1)),
            spec2d((Cout_p, 1)),
        ],
        out_specs=spec2d((Cout_p, Mp_pad)),
        scratch_shapes=[pltpu.VMEM((9 * Cmax_p, Mp_pad), mxu_dtype)],
        compiler_params=pltpu.CompilerParams(
            dimension_semantics=("arbitrary",),
            vmem_limit_bytes=vmem_limit),
    )(xf, mask, w1m, g1c, be1c, w2m, g2c, be2c)

    # (Cout_p, Mp_pad) -> drop flat tail, border ring, channel pad -> NCHW.
    out = out[:Cout, :Mp].reshape(Cout, N, Hp, Wp)[:, :, 1:H + 1, 1:W + 1]
    return jnp.transpose(out, (1, 0, 2, 3))


def _reference_double_conv(x_nchw, params):
    """Pure-JAX reference: lax conv (with bias) + train-mode BN + ReLU, twice."""
    w1, b1, g1, be1, w2, b2, g2, be2 = params
    x = jnp.transpose(x_nchw, (0, 2, 3, 1)).astype(jnp.float32)

    def conv(x, w, b):
        y = jax.lax.conv_general_dilated(
            x, w, window_strides=(1, 1), padding="SAME",
            dimension_numbers=("NHWC", "HWIO", "NHWC"))
        return y + b

    def bn_relu(h, g, be):
        mu = h.mean(axis=(0, 1, 2))
        var = ((h - mu) ** 2).mean(axis=(0, 1, 2))
        return jnp.maximum((h - mu) / jnp.sqrt(var + EPS) * g + be, 0.0)

    h = bn_relu(conv(x, w1, b1), g1, be1)
    h = bn_relu(conv(h, w2, b2), g2, be2)
    return jnp.transpose(h, (0, 3, 1, 2))


def _init_params(key, in_ch, out_ch):
    ks = jax.random.split(key, 8)
    w1 = 0.1 * jax.random.normal(ks[0], (3, 3, in_ch, out_ch), jnp.float32)
    b1 = 0.1 * jax.random.normal(ks[1], (out_ch,), jnp.float32)
    g1 = 1.0 + 0.1 * jax.random.normal(ks[2], (out_ch,), jnp.float32)
    be1 = 0.1 * jax.random.normal(ks[3], (out_ch,), jnp.float32)
    w2 = 0.1 * jax.random.normal(ks[4], (3, 3, out_ch, out_ch), jnp.float32)
    b2 = 0.1 * jax.random.normal(ks[5], (out_ch,), jnp.float32)
    g2 = 1.0 + 0.1 * jax.random.normal(ks[6], (out_ch,), jnp.float32)
    be2 = 0.1 * jax.random.normal(ks[7], (out_ch,), jnp.float32)
    return (w1, b1, g1, be1, w2, b2, g2, be2)


if __name__ == "__main__":
    key = jax.random.PRNGKey(0)
    k_x, k_p = jax.random.split(key)

    N, in_ch, out_ch, H, W = 2, 4, 8, 16, 16
    x = jax.random.normal(k_x, (N, in_ch, H, W), jnp.float32)
    params = _init_params(k_p, in_ch, out_ch)

    ref = jax.block_until_ready(_reference_double_conv(x, params))

    # f32 MXU path: faithful to the module semantics (tight tolerance).
    out = jax.block_until_ready(double_conv_pallas(x, params, mxu_dtype=jnp.float32))
    assert out.shape == (N, out_ch, H, W)
    assert bool(jnp.all(jnp.isfinite(out)))
    assert jnp.allclose(out, ref, atol=2e-4, rtol=2e-4), "f32 kernel mismatch vs reference"

    # Default bf16 MXU operands (perf-recommended on v5e/v6e/v7x); BN math stays
    # f32, so only matmul rounding differs -> loose sanity tolerance.
    out_bf16 = jax.block_until_ready(double_conv_pallas(x, params))
    assert out_bf16.shape == (N, out_ch, H, W)
    assert bool(jnp.all(jnp.isfinite(out_bf16)))
    diff = jnp.abs(out_bf16 - ref)
    assert float(jnp.max(diff)) < 0.5 and float(jnp.mean(diff)) < 0.05, "bf16 kernel diverged"

    print("KERNEL_OK")
</pallas_src>

<mosaic_0001>
module attributes {stable_mosaic.version = 11 : i64} {
  func.func @_double_conv_kernel(%arg0: i32, %arg1: memref<8x768xf32, #tpu.memory_space<vmem>>, %arg2: memref<1x768xf32, #tpu.memory_space<vmem>>, %arg3: memref<8x72xf32, #tpu.memory_space<vmem>>, %arg4: memref<8x1xf32, #tpu.memory_space<vmem>>, %arg5: memref<8x1xf32, #tpu.memory_space<vmem>>, %arg6: memref<8x72xf32, #tpu.memory_space<vmem>>, %arg7: memref<8x1xf32, #tpu.memory_space<vmem>>, %arg8: memref<8x1xf32, #tpu.memory_space<vmem>>, %arg9: memref<8x768xf32, #tpu.memory_space<vmem>>, %arg10: memref<72x768xf32, #tpu.memory_space<vmem>>) attributes {dimension_semantics = [#tpu.dimension_semantics<arbitrary>], iteration_bounds = array<i64: 1>, scalar_prefetch = 0 : i64, scratch_operands = 1 : i64, tpu.core_type = #tpu.core_type<tc>, window_params = [{pipeline_mode = #tpu.pipeline_mode<synchronous>, transform_indices = @transform_0, window_bounds = array<i64: 8, 768>}, {pipeline_mode = #tpu.pipeline_mode<synchronous>, transform_indices = @transform_1, window_bounds = array<i64: 1, 768>}, {pipeline_mode = #tpu.pipeline_mode<synchronous>, transform_indices = @transform_2, window_bounds = array<i64: 8, 72>}, {pipeline_mode = #tpu.pipeline_mode<synchronous>, transform_indices = @transform_3, window_bounds = array<i64: 8, 1>}, {pipeline_mode = #tpu.pipeline_mode<synchronous>, transform_indices = @transform_4, window_bounds = array<i64: 8, 1>}, {pipeline_mode = #tpu.pipeline_mode<synchronous>, transform_indices = @transform_5, window_bounds = array<i64: 8, 72>}, {pipeline_mode = #tpu.pipeline_mode<synchronous>, transform_indices = @transform_6, window_bounds = array<i64: 8, 1>}, {pipeline_mode = #tpu.pipeline_mode<synchronous>, transform_indices = @transform_7, window_bounds = array<i64: 8, 1>}, {pipeline_mode = #tpu.pipeline_mode<synchronous>, transform_indices = @transform_8, window_bounds = array<i64: 8, 768>}]} {
    %c0 = arith.constant 0 : index
    %c0_0 = arith.constant 0 : index
    %0 = vector.load %arg2[%c0, %c0_0] : memref<1x768xf32, #tpu.memory_space<vmem>>, vector<1x768xf32>
    %c0_1 = arith.constant 0 : index
    %c0_2 = arith.constant 0 : index
    %1 = vector.load %arg1[%c0_1, %c0_2] : memref<8x768xf32, #tpu.memory_space<vmem>>, vector<8x768xf32>
    %c19_i32 = arith.constant 19 : i32
    %2 = tpu.dynamic_rotate %1 by %c19_i32 dim 1 : vector<8x768xf32>, i32 -> vector<8x768xf32>
    %c0_3 = arith.constant 0 : index
    %c0_4 = arith.constant 0 : index
    %3 = vector.load %arg10[%c0_3, %c0_4] : memref<72x768xf32, #tpu.memory_space<vmem>>, vector<8x768xf32>
    tpu.vector_store %arg10[%c0_3, %c0_4], %2 {strides = array<i32>} : memref<72x768xf32, #tpu.memory_space<vmem>>, vector<8x768xf32>,
    %c18_i32 = arith.constant 18 : i32
    %4 = tpu.dynamic_rotate %1 by %c18_i32 dim 1 : vector<8x768xf32>, i32 -> vector<8x768xf32>
    %c8 = arith.constant 8 : index
    %c0_5 = arith.constant 0 : index
    %5 = vector.load %arg10[%c8, %c0_5] : memref<72x768xf32, #tpu.memory_space<vmem>>, vector<8x768xf32>
    tpu.vector_store %arg10[%c8, %c0_5], %4 {strides = array<i32>} : memref<72x768xf32, #tpu.memory_space<vmem>>, vector<8x768xf32>,
    %c17_i32 = arith.constant 17 : i32
    %6 = tpu.dynamic_rotate %1 by %c17_i32 dim 1 : vector<8x768xf32>, i32 -> vector<8x768xf32>
    %c16 = arith.constant 16 : index
    %c0_6 = arith.constant 0 : index
    %7 = vector.load %arg10[%c16, %c0_6] : memref<72x768xf32, #tpu.memory_space<vmem>>, vector<8x768xf32>
    tpu.vector_store %arg10[%c16, %c0_6], %6 {strides = array<i32>} : memref<72x768xf32, #tpu.memory_space<vmem>>, vector<8x768xf32>,
    %c1_i32 = arith.constant 1 : i32
    %8 = tpu.dynamic_rotate %1 by %c1_i32 dim 1 : vector<8x768xf32>, i32 -> vector<8x768xf32>
    %c24 = arith.constant 24 : index
    %c0_7 = arith.constant 0 : index
    %9 = vector.load %arg10[%c24, %c0_7] : memref<72x768xf32, #tpu.memory_space<vmem>>, vector<8x768xf32>
    tpu.vector_store %arg10[%c24, %c0_7], %8 {strides = array<i32>} : memref<72x768xf32, #tpu.memory_space<vmem>>, vector<8x768xf32>,
    %c32 = arith.constant 32 : index
    %c0_8 = arith.constant 0 : index
    %10 = vector.load %arg10[%c32, %c0_8] : memref<72x768xf32, #tpu.memory_space<vmem>>, vector<8x768xf32>
    tpu.vector_store %arg10[%c32, %c0_8], %1 {strides = array<i32>} : memref<72x768xf32, #tpu.memory_space<vmem>>, vector<8x768xf32>,
    %c767_i32 = arith.constant 767 : i32
    %11 = tpu.dynamic_rotate %1 by %c767_i32 dim 1 : vector<8x768xf32>, i32 -> vector<8x768xf32>
    %c40 = arith.constant 40 : index
    %c0_9 = arith.constant 0 : index
    %12 = vector.load %arg10[%c40, %c0_9] : memref<72x768xf32, #tpu.memory_space<vmem>>, vector<8x768xf32>
    tpu.vector_store %arg10[%c40, %c0_9], %11 {strides = array<i32>} : memref<72x768xf32, #tpu.memory_space<vmem>>, vector<8x768xf32>,
    %c751_i32 = arith.constant 751 : i32
    %13 = tpu.dynamic_rotate %1 by %c751_i32 dim 1 : vector<8x768xf32>, i32 -> vector<8x768xf32>
    %c48 = arith.constant 48 : index
    %c0_10 = arith.constant 0 : index
    %14 = vector.load %arg10[%c48, %c0_10] : memref<72x768xf32, #tpu.memory_space<vmem>>, vector<8x768xf32>
    tpu.vector_store %arg10[%c48, %c0_10], %13 {strides = array<i32>} : memref<72x768xf32, #tpu.memory_space<vmem>>, vector<8x768xf32>,
    %c750_i32 = arith.constant 750 : i32
    %15 = tpu.dynamic_rotate %1 by %c750_i32 dim 1 : vector<8x768xf32>, i32 -> vector<8x768xf32>
    %c56 = arith.constant 56 : index
    %c0_11 = arith.constant 0 : index
    %16 = vector.load %arg10[%c56, %c0_11] : memref<72x768xf32, #tpu.memory_space<vmem>>, vector<8x768xf32>
    tpu.vector_store %arg10[%c56, %c0_11], %15 {strides = array<i32>} : memref<72x768xf32, #tpu.memory_space<vmem>>, vector<8x768xf32>,
    %c749_i32 = arith.constant 749 : i32
    %17 = tpu.dynamic_rotate %1 by %c749_i32 dim 1 : vector<8x768xf32>, i32 -> vector<8x768xf32>
    %c64 = arith.constant 64 : index
    %c0_12 = arith.constant 0 : index
    %18 = vector.load %arg10[%c64, %c0_12] : memref<72x768xf32, #tpu.memory_space<vmem>>, vector<8x768xf32>
    tpu.vector_store %arg10[%c64, %c0_12], %17 {strides = array<i32>} : memref<72x768xf32, #tpu.memory_space<vmem>>, vector<8x768xf32>,
    %c0_13 = arith.constant 0 : index
    %c0_14 = arith.constant 0 : index
    %19 = vector.load %arg3[%c0_13, %c0_14] : memref<8x72xf32, #tpu.memory_space<vmem>>, vector<8x72xf32>
    %c0_15 = arith.constant 0 : index
    %c0_16 = arith.constant 0 : index
    %20 = vector.load %arg10[%c0_15, %c0_16] : memref<72x768xf32, #tpu.memory_space<vmem>>, vector<72x768xf32>
    %cst = arith.constant dense<0.000000e+00> : vector<8x768xf32>
    %21 = tpu.matmul %19, %20, %cst {dimension_numbers = #tpu.dot_dimension_numbers<[1], [0], [0], [1], [0, 0, 1, 1], [], []>} : vector<8x72xf32>, vector<72x768xf32>, vector<8x768xf32> -> vector<8x768xf32>
    %22 = vector.broadcast %0 : vector<1x768xf32> to vector<8x768xf32>
    %23 = arith.mulf %21, %22 : vector<8x768xf32>
    %cst_17 = arith.constant dense<0.000000e+00> : vector<8xf32>
    %24 = vector.multi_reduction <add>, %23, %cst_17 [1] : vector<8x768xf32> to vector<8xf32>
    %25 = vector.shape_cast %24 : vector<8xf32> to vector<8x1xf32>
    %26 = arith.mulf %23, %21 : vector<8x768xf32>
    %cst_18 = arith.constant dense<0.000000e+00> : vector<8xf32>
    %27 = vector.multi_reduction <add>, %26, %cst_18 [1] : vector<8x768xf32> to vector<8xf32>
    %28 = vector.shape_cast %27 : vector<8xf32> to vector<8x1xf32>
    %cst_19 = arith.constant 0.001953125 : f32
    %29 = vector.broadcast %cst_19 : f32 to vector<8x1xf32>
    %30 = arith.mulf %25, %29 : vector<8x1xf32>
    %cst_20 = arith.constant 0.001953125 : f32
    %31 = vector.broadcast %cst_20 : f32 to vector<8x1xf32>
    %32 = arith.mulf %28, %31 : vector<8x1xf32>
    %33 = arith.mulf %30, %30 : vector<8x1xf32>
    %34 = arith.subf %32, %33 : vector<8x1xf32>
    %cst_21 = arith.constant 0.000000e+00 : f32
    %35 = vector.broadcast %cst_21 : f32 to vector<8x1xf32>
    %36 = arith.maximumf %34, %35 : vector<8x1xf32>
    %c0_22 = arith.constant 0 : index
    %c0_23 = arith.constant 0 : index
    %37 = vector.load %arg4[%c0_22, %c0_23] : memref<8x1xf32, #tpu.memory_space<vmem>>, vector<8x1xf32>
    %cst_24 = arith.constant 9.99999974E-6 : f32
    %38 = vector.broadcast %cst_24 : f32 to vector<8x1xf32>
    %39 = arith.addf %36, %38 : vector<8x1xf32>
    %40 = math.rsqrt %39 : vector<8x1xf32>
    %41 = arith.mulf %37, %40 : vector<8x1xf32>
    %c0_25 = arith.constant 0 : index
    %c0_26 = arith.constant 0 : index
    %42 = vector.load %arg5[%c0_25, %c0_26] : memref<8x1xf32, #tpu.memory_space<vmem>>, vector<8x1xf32>
    %43 = arith.mulf %30, %41 : vector<8x1xf32>
    %44 = arith.subf %42, %43 : vector<8x1xf32>
    %45 = vector.broadcast %41 : vector<8x1xf32> to vector<8x768xf32>
    %46 = arith.mulf %21, %45 : vector<8x768xf32>
    %47 = vector.broadcast %44 : vector<8x1xf32> to vector<8x768xf32>
    %48 = arith.addf %46, %47 : vector<8x768xf32>
    %cst_27 = arith.constant 0.000000e+00 : f32
    %49 = vector.broadcast %cst_27 : f32 to vector<8x768xf32>
    %50 = arith.maximumf %48, %49 : vector<8x768xf32>
    %51 = vector.broadcast %0 : vector<1x768xf32> to vector<8x768xf32>
    %52 = arith.mulf %50, %51 : vector<8x768xf32>
    %c19_i32_28 = arith.constant 19 : i32
    %53 = tpu.dynamic_rotate %52 by %c19_i32_28 dim 1 : vector<8x768xf32>, i32 -> vector<8x768xf32>
    %c0_29 = arith.constant 0 : index
    %c0_30 = arith.constant 0 : index
    %54 = vector.load %arg10[%c0_29, %c0_30] : memref<72x768xf32, #tpu.memory_space<vmem>>, vector<8x768xf32>
    tpu.vector_store %arg10[%c0_29, %c0_30], %53 {strides = array<i32>} : memref<72x768xf32, #tpu.memory_space<vmem>>, vector<8x768xf32>,
    %c18_i32_31 = arith.constant 18 : i32
    %55 = tpu.dynamic_rotate %52 by %c18_i32_31 dim 1 : vector<8x768xf32>, i32 -> vector<8x768xf32>
    %c8_32 = arith.constant 8 : index
    %c0_33 = arith.constant 0 : index
    %56 = vector.load %arg10[%c8_32, %c0_33] : memref<72x768xf32, #tpu.memory_space<vmem>>, vector<8x768xf32>
    tpu.vector_store %arg10[%c8_32, %c0_33], %55 {strides = array<i32>} : memref<72x768xf32, #tpu.memory_space<vmem>>, vector<8x768xf32>,
    %c17_i32_34 = arith.constant 17 : i32
    %57 = tpu.dynamic_rotate %52 by %c17_i32_34 dim 1 : vector<8x768xf32>, i32 -> vector<8x768xf32>
    %c16_35 = arith.constant 16 : index
    %c0_36 = arith.constant 0 : index
    %58 = vector.load %arg10[%c16_35, %c0_36] : memref<72x768xf32, #tpu.memory_space<vmem>>, vector<8x768xf32>
    tpu.vector_store %arg10[%c16_35, %c0_36], %57 {strides = array<i32>} : memref<72x768xf32, #tpu.memory_space<vmem>>, vector<8x768xf32>,
    %c1_i32_37 = arith.constant 1 : i32
    %59 = tpu.dynamic_rotate %52 by %c1_i32_37 dim 1 : vector<8x768xf32>, i32 -> vector<8x768xf32>
    %c24_38 = arith.constant 24 : index
    %c0_39 = arith.constant 0 : index
    %60 = vector.load %arg10[%c24_38, %c0_39] : memref<72x768xf32, #tpu.memory_space<vmem>>, vector<8x768xf32>
    tpu.vector_store %arg10[%c24_38, %c0_39], %59 {strides = array<i32>} : memref<72x768xf32, #tpu.memory_space<vmem>>, vector<8x768xf32>,
    %c32_40 = arith.constant 32 : index
    %c0_41 = arith.constant 0 : index
    %61 = vector.load %arg10[%c32_40, %c0_41] : memref<72x768xf32, #tpu.memory_space<vmem>>, vector<8x768xf32>
    tpu.vector_store %arg10[%c32_40, %c0_41], %52 {strides = array<i32>} : memref<72x768xf32, #tpu.memory_space<vmem>>, vector<8x768xf32>,
    %c767_i32_42 = arith.constant 767 : i32
    %62 = tpu.dynamic_rotate %52 by %c767_i32_42 dim 1 : vector<8x768xf32>, i32 -> vector<8x768xf32>
    %c40_43 = arith.constant 40 : index
    %c0_44 = arith.constant 0 : index
    %63 = vector.load %arg10[%c40_43, %c0_44] : memref<72x768xf32, #tpu.memory_space<vmem>>, vector<8x768xf32>
    tpu.vector_store %arg10[%c40_43, %c0_44], %62 {strides = array<i32>} : memref<72x768xf32, #tpu.memory_space<vmem>>, vector<8x768xf32>,
    %c751_i32_45 = arith.constant 751 : i32
    %64 = tpu.dynamic_rotate %52 by %c751_i32_45 dim 1 : vector<8x768xf32>, i32 -> vector<8x768xf32>
    %c48_46 = arith.constant 48 : index
    %c0_47 = arith.constant 0 : index
    %65 = vector.load %arg10[%c48_46, %c0_47] : memref<72x768xf32, #tpu.memory_space<vmem>>, vector<8x768xf32>
    tpu.vector_store %arg10[%c48_46, %c0_47], %64 {strides = array<i32>} : memref<72x768xf32, #tpu.memory_space<vmem>>, vector<8x768xf32>,
    %c750_i32_48 = arith.constant 750 : i32
    %66 = tpu.dynamic_rotate %52 by %c750_i32_48 dim 1 : vector<8x768xf32>, i32 -> vector<8x768xf32>
    %c56_49 = arith.constant 56 : index
    %c0_50 = arith.constant 0 : index
    %67 = vector.load %arg10[%c56_49, %c0_50] : memref<72x768xf32, #tpu.memory_space<vmem>>, vector<8x768xf32>
    tpu.vector_store %arg10[%c56_49, %c0_50], %66 {strides = array<i32>} : memref<72x768xf32, #tpu.memory_space<vmem>>, vector<8x768xf32>,
    %c749_i32_51 = arith.constant 749 : i32
    %68 = tpu.dynamic_rotate %52 by %c749_i32_51 dim 1 : vector<8x768xf32>, i32 -> vector<8x768xf32>
    %c64_52 = arith.constant 64 : index
    %c0_53 = arith.constant 0 : index
    %69 = vector.load %arg10[%c64_52, %c0_53] : memref<72x768xf32, #tpu.memory_space<vmem>>, vector<8x768xf32>
    tpu.vector_store %arg10[%c64_52, %c0_53], %68 {strides = array<i32>} : memref<72x768xf32, #tpu.memory_space<vmem>>, vector<8x768xf32>,
    %c0_54 = arith.constant 0 : index
    %c0_55 = arith.constant 0 : index
    %70 = vector.load %arg6[%c0_54, %c0_55] : memref<8x72xf32, #tpu.memory_space<vmem>>, vector<8x72xf32>
    %c0_56 = arith.constant 0 : index
    %c0_57 = arith.constant 0 : index
    %71 = vector.load %arg10[%c0_56, %c0_57] : memref<72x768xf32, #tpu.memory_space<vmem>>, vector<72x768xf32>
    %cst_58 = arith.constant dense<0.000000e+00> : vector<8x768xf32>
    %72 = tpu.matmul %70, %71, %cst_58 {dimension_numbers = #tpu.dot_dimension_numbers<[1], [0], [0], [1], [0, 0, 1, 1], [], []>} : vector<8x72xf32>, vector<72x768xf32>, vector<8x768xf32> -> vector<8x768xf32>
    %73 = vector.broadcast %0 : vector<1x768xf32> to vector<8x768xf32>
    %74 = arith.mulf %72, %73 : vector<8x768xf32>
    %cst_59 = arith.constant dense<0.000000e+00> : vector<8xf32>
    %75 = vector.multi_reduction <add>, %74, %cst_59 [1] : vector<8x768xf32> to vector<8xf32>
    %76 = vector.shape_cast %75 : vector<8xf32> to vector<8x1xf32>
    %77 = arith.mulf %74, %72 : vector<8x768xf32>
    %cst_60 = arith.constant dense<0.000000e+00> : vector<8xf32>
    %78 = vector.multi_reduction <add>, %77, %cst_60 [1] : vector<8x768xf32> to vector<8xf32>
    %79 = vector.shape_cast %78 : vector<8xf32> to vector<8x1xf32>
    %cst_61 = arith.constant 0.001953125 : f32
    %80 = vector.broadcast %cst_61 : f32 to vector<8x1xf32>
    %81 = arith.mulf %76, %80 : vector<8x1xf32>
    %cst_62 = arith.constant 0.001953125 : f32
    %82 = vector.broadcast %cst_62 : f32 to vector<8x1xf32>
    %83 = arith.mulf %79, %82 : vector<8x1xf32>
    %84 = arith.mulf %81, %81 : vector<8x1xf32>
    %85 = arith.subf %83, %84 : vector<8x1xf32>
    %cst_63 = arith.constant 0.000000e+00 : f32
    %86 = vector.broadcast %cst_63 : f32 to vector<8x1xf32>
    %87 = arith.maximumf %85, %86 : vector<8x1xf32>
    %c0_64 = arith.constant 0 : index
    %c0_65 = arith.constant 0 : index
    %88 = vector.load %arg7[%c0_64, %c0_65] : memref<8x1xf32, #tpu.memory_space<vmem>>, vector<8x1xf32>
    %cst_66 = arith.constant 9.99999974E-6 : f32
    %89 = vector.broadcast %cst_66 : f32 to vector<8x1xf32>
    %90 = arith.addf %87, %89 : vector<8x1xf32>
    %91 = math.rsqrt %90 : vector<8x1xf32>
    %92 = arith.mulf %88, %91 : vector<8x1xf32>
    %c0_67 = arith.constant 0 : index
    %c0_68 = arith.constant 0 : index
    %93 = vector.load %arg8[%c0_67, %c0_68] : memref<8x1xf32, #tpu.memory_space<vmem>>, vector<8x1xf32>
    %94 = arith.mulf %81, %92 : vector<8x1xf32>
    %95 = arith.subf %93, %94 : vector<8x1xf32>
    %96 = vector.broadcast %92 : vector<8x1xf32> to vector<8x768xf32>
    %97 = arith.mulf %72, %96 : vector<8x768xf32>
    %98 = vector.broadcast %95 : vector<8x1xf32> to vector<8x768xf32>
    %99 = arith.addf %97, %98 : vector<8x768xf32>
    %cst_69 = arith.constant 0.000000e+00 : f32
    %100 = vector.broadcast %cst_69 : f32 to vector<8x768xf32>
    %101 = arith.maximumf %99, %100 : vector<8x768xf32>
    %102 = vector.broadcast %0 : vector<1x768xf32> to vector<8x768xf32>
    %103 = arith.mulf %101, %102 : vector<8x768xf32>
    %c0_70 = arith.constant 0 : index
    %c0_71 = arith.constant 0 : index
    %104 = vector.load %arg9[%c0_70, %c0_71] : memref<8x768xf32, #tpu.memory_space<vmem>>, vector<8x768xf32>
    tpu.vector_store %arg9[%c0_70, %c0_71], %103 {strides = array<i32>} : memref<8x768xf32, #tpu.memory_space<vmem>>, vector<8x768xf32>,
    return
  }
  func.func @transform_0(%arg0: i32) -> (i32, i32) {
    %c0_i32 = arith.constant 0 : i32
    %c0_i32_0 = arith.constant 0 : i32
    %c0_i32_1 = arith.constant 0 : i32
    return %c0_i32, %c0_i32_0 : i32, i32
  }
  func.func @transform_1(%arg0: i32) -> (i32, i32) {
    %c0_i32 = arith.constant 0 : i32
    %c0_i32_0 = arith.constant 0 : i32
    %c0_i32_1 = arith.constant 0 : i32
    return %c0_i32, %c0_i32_0 : i32, i32
  }
  func.func @transform_2(%arg0: i32) -> (i32, i32) {
    %c0_i32 = arith.constant 0 : i32
    %c0_i32_0 = arith.constant 0 : i32
    %c0_i32_1 = arith.constant 0 : i32
    return %c0_i32, %c0_i32_0 : i32, i32
  }
  func.func @transform_3(%arg0: i32) -> (i32, i32) {
    %c0_i32 = arith.constant 0 : i32
    %c0_i32_0 = arith.constant 0 : i32
    %c0_i32_1 = arith.constant 0 : i32
    return %c0_i32, %c0_i32_0 : i32, i32
  }
  func.func @transform_4(%arg0: i32) -> (i32, i32) {
    %c0_i32 = arith.constant 0 : i32
    %c0_i32_0 = arith.constant 0 : i32
    %c0_i32_1 = arith.constant 0 : i32
    return %c0_i32, %c0_i32_0 : i32, i32
  }
  func.func @transform_5(%arg0: i32) -> (i32, i32) {
    %c0_i32 = arith.constant 0 : i32
    %c0_i32_0 = arith.constant 0 : i32
    %c0_i32_1 = arith.constant 0 : i32
    return %c0_i32, %c0_i32_0 : i32, i32
  }
  func.func @transform_6(%arg0: i32) -> (i32, i32) {
    %c0_i32 = arith.constant 0 : i32
    %c0_i32_0 = arith.constant 0 : i32
    %c0_i32_1 = arith.constant 0 : i32
    return %c0_i32, %c0_i32_0 : i32, i32
  }
  func.func @transform_7(%arg0: i32) -> (i32, i32) {
    %c0_i32 = arith.constant 0 : i32
    %c0_i32_0 = arith.constant 0 : i32
    %c0_i32_1 = arith.constant 0 : i32
    return %c0_i32, %c0_i32_0 : i32, i32
  }
  func.func @transform_8(%arg0: i32) -> (i32, i32) {
    %c0_i32 = arith.constant 0 : i32
    %c0_i32_0 = arith.constant 0 : i32
    %c0_i32_1 = arith.constant 0 : i32
    return %c0_i32, %c0_i32_0 : i32, i32
  }
}

</mosaic_0001>

<llo_original>
// kernel: tpu_custom_call.1
$region0: #{tpu_custom_call.1}
  #allocation0 [shape = 'u32[]', space=smem, size = 0x4, offset = 0x4, fixed_abs, tag = 'smem constant byte address 0x4 - core index']
  #allocation1 [shape = 'u32[144,128]{1,0:T(1,128)}', space=vmem, size = 0x12000, scoped, tag = 'internal scratch']
  #allocation2 [shape = 'f32[72,768]{1,0:T(8,128)}', space=vmem, size = 0x36000, scoped, tag = 'scratch operand']
  %s0 = inlined_call_operand.hbm [shape: f32[8,768], index: 0, kind: input, shape index: {}]
  %s1 = inlined_call_operand.vmem [shape: f32[1,768], index: 1, kind: input, shape index: {}]
  %s2 = inlined_call_operand.vmem [shape: f32[8,72], index: 2, kind: input, shape index: {}]
  %s3 = inlined_call_operand.vmem [shape: f32[8,1], index: 3, kind: input, shape index: {}]
  %s4 = inlined_call_operand.vmem [shape: f32[8,1], index: 4, kind: input, shape index: {}]
  %s5 = inlined_call_operand.vmem [shape: f32[8,72], index: 5, kind: input, shape index: {}]
  %s6 = inlined_call_operand.vmem [shape: f32[8,1], index: 6, kind: input, shape index: {}]
  %s7 = inlined_call_operand.vmem [shape: f32[8,1], index: 7, kind: input, shape index: {}]
  %s8 = inlined_call_operand.hbm [shape: f32[8,768], index: 8, kind: output, shape index: {}]
  %s9 = sld [smem:[#allocation0]]
  $region46: #{tpu_custom_call.1} parent=0
    _
  %s11 = ssub.s32 1, %s9
  %s12 = scalar_select 0, %s11, %s9
  $region1: #{tpu_custom_call.1} parent=0
    #allocation3 [shape = 'u8[24576]{0}', space=vmem, size = 0x6000, scoped, tag = 'input window, operand 0, single buffered']
    #allocation4 [shape = 's32[1]{0}', space=sflag, size = 0x4, scoped, tag = 'scoped memory for tpu_custom_call.1']
    #allocation5 [shape = 's32[1]{0}', space=sflag, size = 0x4, scoped, tag = 'scoped memory for tpu_custom_call.1']
    #allocation6 [shape = 'u8[24576]{0}', space=vmem, size = 0x6000, scoped, tag = 'output window, operand 0, single buffered']
    %13 = vsyncpa [#allocation4], 0
    %14 = vsyncpa [#allocation5], 0
    // Predicated region
    $region2: #{tpu_custom_call.1} parent=1 // pred_check
      _
    $region3: #{tpu_custom_call.1} parent=1 // pred_check_branch
      %16 = sbr.rel (0) target = $region5
    $region4: #{tpu_custom_call.1} parent=1 // pred_region
      %s18 = ssub.s32 768, 768
      %19 = vsyncadd [#allocation4], %s18
      %s21 = sshll.u32 [#allocation3], 4
      %s22 = int_to_ptr.vmem [resolvable:$true] %s21
      %24 = dma.hbm_to_vmem [thread:$0]  %s0, 768, %s22, [#allocation4]
    $region5: #{tpu_custom_call.1} parent=1 // pred_fallthru
      _
    // Predicated region
    $region6: #{tpu_custom_call.1} parent=1 // pred_check
      _
    $region7: #{tpu_custom_call.1} parent=1 // pred_check_branch
      %26 = sbr.rel (0) target = $region9
    $region8: #{tpu_custom_call.1} parent=1 // pred_region
      _
    $region9: #{tpu_custom_call.1} parent=1 // pred_fallthru
      _
    // Predicated region
    $region10: #{tpu_custom_call.1} parent=1 // pred_check
      _
    $region11: #{tpu_custom_call.1} parent=1 // pred_check_branch
      %28 = sbr.rel (0) target = $region13
    $region12: #{tpu_custom_call.1} parent=1 // pred_region
      _
    $region13: #{tpu_custom_call.1} parent=1 // pred_fallthru
      _
    // Predicated region
    $region14: #{tpu_custom_call.1} parent=1 // pred_check
      _
    $region15: #{tpu_custom_call.1} parent=1 // pred_check_branch
      %30 = sbr.rel (0) target = $region17
    $region16: #{tpu_custom_call.1} parent=1 // pred_region
      _
    $region17: #{tpu_custom_call.1} parent=1 // pred_fallthru
      _
    // Predicated region
    $region18: #{tpu_custom_call.1} parent=1 // pred_check
      _
    $region19: #{tpu_custom_call.1} parent=1 // pred_check_branch
      %32 = sbr.rel (0) target = $region21
    $region20: #{tpu_custom_call.1} parent=1 // pred_region
      _
    $region21: #{tpu_custom_call.1} parent=1 // pred_fallthru
      _
    // Predicated region
    $region22: #{tpu_custom_call.1} parent=1 // pred_check
      _
    $region23: #{tpu_custom_call.1} parent=1 // pred_check_branch
      %34 = sbr.rel (0) target = $region25
    $region24: #{tpu_custom_call.1} parent=1 // pred_region
      _
    $region25: #{tpu_custom_call.1} parent=1 // pred_fallthru
      _
    // Predicated region
    $region26: #{tpu_custom_call.1} parent=1 // pred_check
      _
    $region27: #{tpu_custom_call.1} parent=1 // pred_check_branch
      %36 = sbr.rel (0) target = $region29
    $region28: #{tpu_custom_call.1} parent=1 // pred_region
      _
    $region29: #{tpu_custom_call.1} parent=1 // pred_fallthru
      _
    // Predicated region
    $region30: #{tpu_custom_call.1} parent=1 // pred_check
      _
    $region31: #{tpu_custom_call.1} parent=1 // pred_check_branch
      %38 = sbr.rel (0) target = $region33
    $region32: #{tpu_custom_call.1} parent=1 // pred_region
      _
    $region33: #{tpu_custom_call.1} parent=1 // pred_fallthru
      _
    // Predicated region
    $region34: #{tpu_custom_call.1} parent=1 // pred_check
      _
    $region35: #{tpu_custom_call.1} parent=1 // pred_check_branch
      %40 = sbr.rel (0) target = $region37
    $region36: #{tpu_custom_call.1} parent=1 // pred_region
      %41 = dma.done [#allocation4], 768
    $region37: #{tpu_custom_call.1} parent=1 // pred_fallthru
      _
    %v42 = vld [vmem:[%s1] sm:$0x3f]
    %v43 = vld [vmem:[#allocation3] sm:$0xff]
    %v44 = vld [vmem:[#allocation3 + $0x8] sm:$0xff]
    %v45 = vld [vmem:[#allocation3 + $0x10] sm:$0xff]
    %v46 = vld [vmem:[#allocation3 + $0x18] sm:$0xff]
    %v47 = vld [vmem:[#allocation3 + $0x20] sm:$0xff]
    %v48 = vld [vmem:[#allocation3 + $0x28] sm:$0xff]
    %49 = vrot.lane.b32.xlu0 %v43, 19
    %v50 = vpop.permute.xlu0 %49
    %51 = vrot.lane.b32.xlu0 %v44, 19
    %v52 = vpop.permute.xlu0 %51
    %53 = vrot.lane.b32.xlu0 %v45, 19
    %v54 = vpop.permute.xlu0 %53
    %55 = vrot.lane.b32.xlu0 %v46, 19
    %v56 = vpop.permute.xlu0 %55
    %57 = vrot.lane.b32.xlu0 %v47, 19
    %v58 = vpop.permute.xlu0 %57
    %59 = vrot.lane.b32.xlu0 %v48, 19
    %v60 = vpop.permute.xlu0 %59
    %v61 = vlaneseq
    %v62 = vand.u32 %v61, 127
    %vm63 = vcmp.lt.s32.totalorder %v62, 19
    %v64 = vsel %vm63, %v58, %v60
    %v65 = vsel %vm63, %v56, %v58
    %v66 = vsel %vm63, %v54, %v56
    %v67 = vsel %vm63, %v52, %v54
    %v68 = vsel %vm63, %v50, %v52
    %v69 = vsel %vm63, %v60, %v50
    %70 = vst [vmem:[#allocation2] sm:$0xff] %v69
    %71 = vst [vmem:[#allocation2 + $0x8] sm:$0xff] %v68
    %72 = vst [vmem:[#allocation2 + $0x10] sm:$0xff] %v67
    %73 = vst [vmem:[#allocation2 + $0x18] sm:$0xff] %v66
    %74 = vst [vmem:[#allocation2 + $0x20] sm:$0xff] %v65
    %75 = vst [vmem:[#allocation2 + $0x28] sm:$0xff] %v64
    %76 = vrot.lane.b32.xlu0 %v43, 18
    %v77 = vpop.permute.xlu0 %76
    %78 = vrot.lane.b32.xlu0 %v44, 18
    %v79 = vpop.permute.xlu0 %78
    %80 = vrot.lane.b32.xlu0 %v45, 18
    %v81 = vpop.permute.xlu0 %80
    %82 = vrot.lane.b32.xlu0 %v46, 18
    %v83 = vpop.permute.xlu0 %82
    %84 = vrot.lane.b32.xlu0 %v47, 18
    %v85 = vpop.permute.xlu0 %84
    %86 = vrot.lane.b32.xlu0 %v48, 18
    %v87 = vpop.permute.xlu0 %86
    %vm88 = vcmp.lt.s32.totalorder %v62, 18
    %v89 = vsel %vm88, %v85, %v87
    %v90 = vsel %vm88, %v83, %v85
    %v91 = vsel %vm88, %v81, %v83
    %v92 = vsel %vm88, %v79, %v81
    %v93 = vsel %vm88, %v77, %v79
    %v94 = vsel %vm88, %v87, %v77
    %95 = vst [vmem:[#allocation2 + $0x30] sm:$0xff] %v94
    %96 = vst [vmem:[#allocation2 + $0x38] sm:$0xff] %v93
    %97 = vst [vmem:[#allocation2 + $0x40] sm:$0xff] %v92
    %98 = vst [vmem:[#allocation2 + $0x48] sm:$0xff] %v91
    %99 = vst [vmem:[#allocation2 + $0x50] sm:$0xff] %v90
    %100 = vst [vmem:[#allocation2 + $0x58] sm:$0xff] %v89
    %101 = vrot.lane.b32.xlu0 %v43, 17
    %v102 = vpop.permute.xlu0 %101
    %103 = vrot.lane.b32.xlu0 %v44, 17
    %v104 = vpop.permute.xlu0 %103
    %105 = vrot.lane.b32.xlu0 %v45, 17
    %v106 = vpop.permute.xlu0 %105
    %107 = vrot.lane.b32.xlu0 %v46, 17
    %v108 = vpop.permute.xlu0 %107
    %109 = vrot.lane.b32.xlu0 %v47, 17
    %v110 = vpop.permute.xlu0 %109
    %111 = vrot.lane.b32.xlu0 %v48, 17
    %v112 = vpop.permute.xlu0 %111
    %vm113 = vcmp.lt.s32.totalorder %v62, 17
    %v114 = vsel %vm113, %v110, %v112
    %v115 = vsel %vm113, %v108, %v110
    %v116 = vsel %vm113, %v106, %v108
    %v117 = vsel %vm113, %v104, %v106
    %v118 = vsel %vm113, %v102, %v104
    %v119 = vsel %vm113, %v112, %v102
    %120 = vst [vmem:[#allocation2 + $0x60] sm:$0xff] %v119
    %121 = vst [vmem:[#allocation2 + $0x68] sm:$0xff] %v118
    %122 = vst [vmem:[#allocation2 + $0x70] sm:$0xff] %v117
    %123 = vst [vmem:[#allocation2 + $0x78] sm:$0xff] %v116
    %124 = vst [vmem:[#allocation2 + $0x80] sm:$0xff] %v115
    %125 = vst [vmem:[#allocation2 + $0x88] sm:$0xff] %v114
    %126 = vrot.lane.b32.xlu0 %v43, 1
    %v127 = vpop.permute.xlu0 %126
    %128 = vrot.lane.b32.xlu0 %v44, 1
    %v129 = vpop.permute.xlu0 %128
    %130 = vrot.lane.b32.xlu0 %v45, 1
    %v131 = vpop.permute.xlu0 %130
    %132 = vrot.lane.b32.xlu0 %v46, 1
    %v133 = vpop.permute.xlu0 %132
    %134 = vrot.lane.b32.xlu0 %v47, 1
    %v135 = vpop.permute.xlu0 %134
    %136 = vrot.lane.b32.xlu0 %v48, 1
    %v137 = vpop.permute.xlu0 %136
    %vm138 = vcmp.lt.s32.totalorder %v62, 1
    %v139 = vsel %vm138, %v135, %v137
    %v140 = vsel %vm138, %v133, %v135
    %v141 = vsel %vm138, %v131, %v133
    %v142 = vsel %vm138, %v129, %v131
    %v143 = vsel %vm138, %v127, %v129
    %v144 = vsel %vm138, %v137, %v127
    %145 = vst [vmem:[#allocation2 + $0x90] sm:$0xff] %v144
    %146 = vst [vmem:[#allocation2 + $0x98] sm:$0xff] %v143
    %147 = vst [vmem:[#allocation2 + $0xa0] sm:$0xff] %v142
    %148 = vst [vmem:[#allocation2 + $0xa8] sm:$0xff] %v141
    %149 = vst [vmem:[#allocation2 + $0xb0] sm:$0xff] %v140
    %150 = vst [vmem:[#allocation2 + $0xb8] sm:$0xff] %v139
    %151 = vst [vmem:[#allocation2 + $0xc0] sm:$0xff] %v43
    %152 = vst [vmem:[#allocation2 + $0xc8] sm:$0xff] %v44
    %153 = vst [vmem:[#allocation2 + $0xd0] sm:$0xff] %v45
    %154 = vst [vmem:[#allocation2 + $0xd8] sm:$0xff] %v46
    %155 = vst [vmem:[#allocation2 + $0xe0] sm:$0xff] %v47
    %156 = vst [vmem:[#allocation2 + $0xe8] sm:$0xff] %v48
    %157 = vrot.lane.b32.xlu0 %v43, 127
    %v158 = vpop.permute.xlu0 %157
    %159 = vrot.lane.b32.xlu0 %v44, 127
    %v160 = vpop.permute.xlu0 %159
    %161 = vrot.lane.b32.xlu0 %v45, 127
    %v162 = vpop.permute.xlu0 %161
    %163 = vrot.lane.b32.xlu0 %v46, 127
    %v164 = vpop.permute.xlu0 %163
    %165 = vrot.lane.b32.xlu0 %v47, 127
    %v166 = vpop.permute.xlu0 %165
    %167 = vrot.lane.b32.xlu0 %v48, 127
    %v168 = vpop.permute.xlu0 %167
    %vm169 = vcmp.lt.s32.totalorder %v62, 127
    %v170 = vsel %vm169, %v166, %v168
    %v171 = vsel %vm169, %v164, %v166
    %v172 = vsel %vm169, %v162, %v164
    %v173 = vsel %vm169, %v160, %v162
    %v174 = vsel %vm169, %v158, %v160
    %v175 = vsel %vm169, %v168, %v158
    %176 = vst [vmem:[#allocation2 + $0xf0] sm:$0xff] %v174
    %177 = vst [vmem:[#allocation2 + $0xf8] sm:$0xff] %v173
    %178 = vst [vmem:[#allocation2 + $0x100] sm:$0xff] %v172
    %179 = vst [vmem:[#allocation2 + $0x108] sm:$0xff] %v171
    %180 = vst [vmem:[#allocation2 + $0x110] sm:$0xff] %v170
    %181 = vst [vmem:[#allocation2 + $0x118] sm:$0xff] %v175
    %182 = vrot.lane.b32.xlu0 %v43, 111
    %v183 = vpop.permute.xlu0 %182
    %184 = vrot.lane.b32.xlu0 %v44, 111
    %v185 = vpop.permute.xlu0 %184
    %186 = vrot.lane.b32.xlu0 %v45, 111
    %v187 = vpop.permute.xlu0 %186
    %188 = vrot.lane.b32.xlu0 %v46, 111
    %v189 = vpop.permute.xlu0 %188
    %190 = vrot.lane.b32.xlu0 %v47, 111
    %v191 = vpop.permute.xlu0 %190
    %192 = vrot.lane.b32.xlu0 %v48, 111
    %v193 = vpop.permute.xlu0 %192
    %vm194 = vcmp.lt.s32.totalorder %v62, 111
    %v195 = vsel %vm194, %v191, %v193
    %v196 = vsel %vm194, %v189, %v191
    %v197 = vsel %vm194, %v187, %v189
    %v198 = vsel %vm194, %v185, %v187
    %v199 = vsel %vm194, %v183, %v185
    %v200 = vsel %vm194, %v193, %v183
    %201 = vst [vmem:[#allocation2 + $0x120] sm:$0xff] %v199
    %202 = vst [vmem:[#allocation2 + $0x128] sm:$0xff] %v198
    %203 = vst [vmem:[#allocation2 + $0x130] sm:$0xff] %v197
    %204 = vst [vmem:[#allocation2 + $0x138] sm:$0xff] %v196
    %205 = vst [vmem:[#allocation2 + $0x140] sm:$0xff] %v195
    %206 = vst [vmem:[#allocation2 + $0x148] sm:$0xff] %v200
    %207 = vrot.lane.b32.xlu0 %v43, 110
    %v208 = vpop.permute.xlu0 %207
    %209 = vrot.lane.b32.xlu0 %v44, 110
    %v210 = vpop.permute.xlu0 %209
    %211 = vrot.lane.b32.xlu0 %v45, 110
    %v212 = vpop.permute.xlu0 %211
    %213 = vrot.lane.b32.xlu0 %v46, 110
    %v214 = vpop.permute.xlu0 %213
    %215 = vrot.lane.b32.xlu0 %v47, 110
    %v216 = vpop.permute.xlu0 %215
    %217 = vrot.lane.b32.xlu0 %v48, 110
    %v218 = vpop.permute.xlu0 %217
    %vm219 = vcmp.lt.s32.totalorder %v62, 110
    %v220 = vsel %vm219, %v216, %v218
    %v221 = vsel %vm219, %v214, %v216
    %v222 = vsel %vm219, %v212, %v214
    %v223 = vsel %vm219, %v210, %v212
    %v224 = vsel %vm219, %v208, %v210
    %v225 = vsel %vm219, %v218, %v208
    %226 = vst [vmem:[#allocation2 + $0x150] sm:$0xff] %v224
    %227 = vst [vmem:[#allocation2 + $0x158] sm:$0xff] %v223
    %228 = vst [vmem:[#allocation2 + $0x160] sm:$0xff] %v222
    %229 = vst [vmem:[#allocation2 + $0x168] sm:$0xff] %v221
    %230 = vst [vmem:[#allocation2 + $0x170] sm:$0xff] %v220
    %231 = vst [vmem:[#allocation2 + $0x178] sm:$0xff] %v225
    %232 = vrot.lane.b32.xlu0 %v43, 109
    %v233 = vpop.permute.xlu0 %232
    %234 = vrot.lane.b32.xlu0 %v44, 109
    %v235 = vpop.permute.xlu0 %234
    %236 = vrot.lane.b32.xlu0 %v45, 109
    %v237 = vpop.permute.xlu0 %236
    %238 = vrot.lane.b32.xlu0 %v46, 109
    %v239 = vpop.permute.xlu0 %238
    %240 = vrot.lane.b32.xlu0 %v47, 109
    %v241 = vpop.permute.xlu0 %240
    %242 = vrot.lane.b32.xlu0 %v48, 109
    %v243 = vpop.permute.xlu0 %242
    %vm244 = vcmp.lt.s32.totalorder %v62, 109
    %v245 = vsel %vm244, %v241, %v243
    %v246 = vsel %vm244, %v239, %v241
    %v247 = vsel %vm244, %v237, %v239
    %v248 = vsel %vm244, %v235, %v237
    %v249 = vsel %vm244, %v233, %v235
    %v250 = vsel %vm244, %v243, %v233
    %251 = vst [vmem:[#allocation2 + $0x180] sm:$0xff] %v249
    %252 = vst [vmem:[#allocation2 + $0x188] sm:$0xff] %v248
    %253 = vst [vmem:[#allocation2 + $0x190] sm:$0xff] %v247
    %254 = vst [vmem:[#allocation2 + $0x198] sm:$0xff] %v246
    %255 = vst [vmem:[#allocation2 + $0x1a0] sm:$0xff] %v245
    %256 = vst [vmem:[#allocation2 + $0x1a8] sm:$0xff] %v250
    %v257 = vld [vmem:[%s2] sm:$0xff]
    %v258 = vld [vmem:[#allocation2] sm:$0xff]
    %v259 = vld [vmem:[#allocation2 + $0x8] sm:$0xff]
    %v260 = vld [vmem:[#allocation2 + $0x10] sm:$0xff]
    %v261 = vld [vmem:[#allocation2 + $0x18] sm:$0xff]
    %v262 = vld [vmem:[#allocation2 + $0x20] sm:$0xff]
    %v263 = vld [vmem:[#allocation2 + $0x28] sm:$0xff]
    %v264 = vld [vmem:[#allocation2 + $0x30] sm:$0xff]
    %v265 = vld [vmem:[#allocation2 + $0x38] sm:$0xff]
    %v266 = vld [vmem:[#allocation2 + $0x40] sm:$0xff]
    %v267 = vld [vmem:[#allocation2 + $0x48] sm:$0xff]
    %v268 = vld [vmem:[#allocation2 + $0x50] sm:$0xff]
    %v269 = vld [vmem:[#allocation2 + $0x58] sm:$0xff]
    %v270 = vld [vmem:[#allocation2 + $0x60] sm:$0xff]
    %v271 = vld [vmem:[#allocation2 + $0x68] sm:$0xff]
    %v272 = vld [vmem:[#allocation2 + $0x70] sm:$0xff]
    %v273 = vld [vmem:[#allocation2 + $0x78] sm:$0xff]
    %v274 = vld [vmem:[#allocation2 + $0x80] sm:$0xff]
    %v275 = vld [vmem:[#allocation2 + $0x88] sm:$0xff]
    %v276 = vld [vmem:[#allocation2 + $0x90] sm:$0xff]
    %v277 = vld [vmem:[#allocation2 + $0x98] sm:$0xff]
    %v278 = vld [vmem:[#allocation2 + $0xa0] sm:$0xff]
    %v279 = vld [vmem:[#allocation2 + $0xa8] sm:$0xff]
    %v280 = vld [vmem:[#allocation2 + $0xb0] sm:$0xff]
    %v281 = vld [vmem:[#allocation2 + $0xb8] sm:$0xff]
    %v282 = vld [vmem:[#allocation2 + $0xc0] sm:$0xff]
    %v283 = vld [vmem:[#allocation2 + $0xc8] sm:$0xff]
    %v284 = vld [vmem:[#allocation2 + $0xd0] sm:$0xff]
    %v285 = vld [vmem:[#allocation2 + $0xd8] sm:$0xff]
    %v286 = vld [vmem:[#allocation2 + $0xe0] sm:$0xff]
    %v287 = vld [vmem:[#allocation2 + $0xe8] sm:$0xff]
    %v288 = vld [vmem:[#allocation2 + $0xf0] sm:$0xff]
    %v289 = vld [vmem:[#allocation2 + $0xf8] sm:$0xff]
    %v290 = vld [vmem:[#allocation2 + $0x100] sm:$0xff]
    %v291 = vld [vmem:[#allocation2 + $0x108] sm:$0xff]
    %v292 = vld [vmem:[#allocation2 + $0x110] sm:$0xff]
    %v293 = vld [vmem:[#allocation2 + $0x118] sm:$0xff]
    %v294 = vld [vmem:[#allocation2 + $0x120] sm:$0xff]
    %v295 = vld [vmem:[#allocation2 + $0x128] sm:$0xff]
    %v296 = vld [vmem:[#allocation2 + $0x130] sm:$0xff]
    %v297 = vld [vmem:[#allocation2 + $0x138] sm:$0xff]
    %v298 = vld [vmem:[#allocation2 + $0x140] sm:$0xff]
    %v299 = vld [vmem:[#allocation2 + $0x148] sm:$0xff]
    %v300 = vld [vmem:[#allocation2 + $0x150] sm:$0xff]
    %v301 = vld [vmem:[#allocation2 + $0x158] sm:$0xff]
    %v302 = vld [vmem:[#allocation2 + $0x160] sm:$0xff]
    %v303 = vld [vmem:[#allocation2 + $0x168] sm:$0xff]
    %v304 = vld [vmem:[#allocation2 + $0x170] sm:$0xff]
    %v305 = vld [vmem:[#allocation2 + $0x178] sm:$0xff]
    %v306 = vld [vmem:[#allocation2 + $0x180] sm:$0xff]
    %v307 = vld [vmem:[#allocation2 + $0x188] sm:$0xff]
    %v308 = vld [vmem:[#allocation2 + $0x190] sm:$0xff]
    %v309 = vld [vmem:[#allocation2 + $0x198] sm:$0xff]
    %v310 = vld [vmem:[#allocation2 + $0x1a0] sm:$0xff]
    %v311 = vld [vmem:[#allocation2 + $0x1a8] sm:$0xff]
    %vm312 = vcmask 588800
    %v314 = vsel %vm312, %v257, 0
    %316 = vmatprep.subr.mxu0 %v259
    %317 = vmatpush1.msra.mxu0 %v258
    %318 = vmatprep.subr.mxu0 %v265
    %319 = vmatpush1.msra.mxu0 %v264
    %320 = vmatprep.subr.mxu0 %v271
    %321 = vmatpush1.msra.mxu0 %v270
    %322 = vmatprep.subr.mxu0 %v277
    %323 = vmatpush1.msra.mxu0 %v276
    %324 = vmatprep.subr.mxu0 %v283
    %325 = vmatpush1.msra.mxu0 %v282
    %326 = vmatprep.subr.mxu0 %v289
    %327 = vmatpush1.msra.mxu0 %v288
    %328 = vmatprep.subr.mxu0 %v295
    %329 = vmatpush1.msra.mxu0 %v294
    %330 = vmatprep.subr.mxu0 %v301
    %331 = vmatpush1.msra.mxu0 %v300
    %332 = vmatprep.subr.mxu0 %v307
    %333 = vmatpush1.msra.mxu0 %v306
    %334 = vmatprep.subr.mxu0 0.0
    %335 = vmatpush1.msra.mxu0 0.0
    %336 = vmatprep.subr.mxu0 0.0
    %337 = vmatpush1.msra.mxu0 0.0
    %338 = vmatprep.subr.mxu0 0.0
    %339 = vmatpush1.msra.mxu0 0.0
    %340 = vmatprep.subr.mxu0 0.0
    %341 = vmatpush1.msra.mxu0 0.0
    %342 = vmatprep.subr.mxu0 0.0
    %343 = vmatpush1.msra.mxu0 0.0
    %344 = vmatprep.subr.mxu0 0.0
    %345 = vmatpush1.msra.mxu0 0.0
    %346 = vmatprep.subr.mxu0 0.0
    %347 = vmatpush1.msra.mxu0 0.0
    %348 = vmatprep.subr.mxu0 0.0
    %349 = vmatpush1.msra.mxu0 0.0
    %350 = vmatprep.subr.mxu0 0.0
    %351 = vmatpush1.msra.mxu0 0.0
    %352 = vmatprep.subr.mxu0 0.0
    %353 = vmatpush1.msra.mxu0 0.0
    %354 = vmatprep.subr.mxu0 0.0
    %355 = vmatpush1.msra.mxu0 0.0
    %356 = vmatprep.subr.mxu0 0.0
    %357 = vmatpush1.msra.mxu0 0.0
    %358 = vmatprep.subr.mxu0 0.0
    %359 = vmatpush1.msra.mxu0 0.0
    %360 = vmatprep.subr.mxu0 0.0
    %361 = vmatpush1.msra.mxu0 0.0
    %362 = vmatprep.subr.mxu0 0.0
    %363 = vmatpush1.msra.mxu0 0.0
    %364 = vmatprep.subr.mxu0 0.0
    %365 = vmatpush1.msra.mxu0 0.0
    %366 = vmatprep.subr.mxu0 0.0
    %367 = vmatpush1.msra.mxu0 0.0
    %368 = vmatprep.subr.mxu0 0.0
    %369 = vmatpush1.msra.mxu0 0.0
    %370 = vmatprep.subr.mxu0 0.0
    %371 = vmatpush1.msra.mxu0 0.0
    %372 = vmatprep.subr.mxu0 0.0
    %373 = vmatpush1.msra.mxu0 0.0
    %374 = vmatprep.subr.mxu0 0.0
    %375 = vmatpush1.msra.mxu0 0.0
    %376 = vmatprep.subr.mxu0 0.0
    %377 = vmatpush1.msra.mxu0 0.0
    %378 = vmatprep.subr.mxu0 0.0
    %379 = vmatpush1.msra.mxu0 0.0
    %380 = vmatprep.mubr.f32.mxu0 0.0
    %381 = vmatmul.mubr.f32.gmra.mrb[0].mxu0 %v314
    %v382 = vpop.f32.mrb[0].mxu0
    %v383 = vadd.f32 0.0, %v382
    %v384 = vpop.f32.mrb[0].mxu0
    %v385 = vadd.f32 0.0, %v384
    %386 = vdwg.mxu0
    %387 = vmatprep.subr.mxu0 %v261
    %388 = vmatpush1.msra.mxu0 %v260
    %389 = vmatprep.subr.mxu0 %v267
    %390 = vmatpush1.msra.mxu0 %v266
    %391 = vmatprep.subr.mxu0 %v273
    %392 = vmatpush1.msra.mxu0 %v272
    %393 = vmatprep.subr.mxu0 %v279
    %394 = vmatpush1.msra.mxu0 %v278
    %395 = vmatprep.subr.mxu0 %v285
    %396 = vmatpush1.msra.mxu0 %v284
    %397 = vmatprep.subr.mxu0 %v291
    %398 = vmatpush1.msra.mxu0 %v290
    %399 = vmatprep.subr.mxu0 %v297
    %400 = vmatpush1.msra.mxu0 %v296
    %401 = vmatprep.subr.mxu0 %v303
    %402 = vmatpush1.msra.mxu0 %v302
    %403 = vmatprep.subr.mxu0 %v309
    %404 = vmatpush1.msra.mxu0 %v308
    %405 = vmatprep.subr.mxu0 0.0
    %406 = vmatpush1.msra.mxu0 0.0
    %407 = vmatprep.subr.mxu0 0.0
    %408 = vmatpush1.msra.mxu0 0.0
    %409 = vmatprep.subr.mxu0 0.0
    %410 = vmatpush1.msra.mxu0 0.0
    %411 = vmatprep.subr.mxu0 0.0
    %412 = vmatpush1.msra.mxu0 0.0
    %413 = vmatprep.subr.mxu0 0.0
    %414 = vmatpush1.msra.mxu0 0.0
    %415 = vmatprep.subr.mxu0 0.0
    %416 = vmatpush1.msra.mxu0 0.0
    %417 = vmatprep.subr.mxu0 0.0
    %418 = vmatpush1.msra.mxu0 0.0
    %419 = vmatprep.subr.mxu0 0.0
    %420 = vmatpush1.msra.mxu0 0.0
    %421 = vmatprep.subr.mxu0 0.0
    %422 = vmatpush1.msra.mxu0 0.0
    %423 = vmatprep.subr.mxu0 0.0
    %424 = vmatpush1.msra.mxu0 0.0
    %425 = vmatprep.subr.mxu0 0.0
    %426 = vmatpush1.msra.mxu0 0.0
    %427 = vmatprep.subr.mxu0 0.0
    %428 = vmatpush1.msra.mxu0 0.0
    %429 = vmatprep.subr.mxu0 0.0
    %430 = vmatpush1.msra.mxu0 0.0
    %431 = vmatprep.subr.mxu0 0.0
    %432 = vmatpush1.msra.mxu0 0.0
    %433 = vmatprep.subr.mxu0 0.0
    %434 = vmatpush1.msra.mxu0 0.0
    %435 = vmatprep.subr.mxu0 0.0
    %436 = vmatpush1.msra.mxu0 0.0
    %437 = vmatprep.subr.mxu0 0.0
    %438 = vmatpush1.msra.mxu0 0.0
    %439 = vmatprep.subr.mxu0 0.0
    %440 = vmatpush1.msra.mxu0 0.0
    %441 = vmatprep.subr.mxu0 0.0
    %442 = vmatpush1.msra.mxu0 0.0
    %443 = vmatprep.subr.mxu0 0.0
    %444 = vmatpush1.msra.mxu0 0.0
    %445 = vmatprep.subr.mxu0 0.0
    %446 = vmatpush1.msra.mxu0 0.0
    %447 = vmatprep.subr.mxu0 0.0
    %448 = vmatpush1.msra.mxu0 0.0
    %449 = vmatprep.subr.mxu0 0.0
    %450 = vmatpush1.msra.mxu0 0.0
    %451 = vmatprep.mubr.f32.mxu0 0.0
    %452 = vmatmul.mubr.f32.gmra.mrb[0].mxu0 %v314
    %v453 = vpop.f32.mrb[0].mxu0
    %v454 = vadd.f32 0.0, %v453
    %v455 = vpop.f32.mrb[0].mxu0
    %v456 = vadd.f32 0.0, %v455
    %457 = vdwg.mxu0
    %458 = vmatprep.subr.mxu0 %v263
    %459 = vmatpush1.msra.mxu0 %v262
    %460 = vmatprep.subr.mxu0 %v269
    %461 = vmatpush1.msra.mxu0 %v268
    %462 = vmatprep.subr.mxu0 %v275
    %463 = vmatpush1.msra.mxu0 %v274
    %464 = vmatprep.subr.mxu0 %v281
    %465 = vmatpush1.msra.mxu0 %v280
    %466 = vmatprep.subr.mxu0 %v287
    %467 = vmatpush1.msra.mxu0 %v286
    %468 = vmatprep.subr.mxu0 %v293
    %469 = vmatpush1.msra.mxu0 %v292
    %470 = vmatprep.subr.mxu0 %v299
    %471 = vmatpush1.msra.mxu0 %v298
    %472 = vmatprep.subr.mxu0 %v305
    %473 = vmatpush1.msra.mxu0 %v304
    %474 = vmatprep.subr.mxu0 %v311
    %475 = vmatpush1.msra.mxu0 %v310
    %476 = vmatprep.subr.mxu0 0.0
    %477 = vmatpush1.msra.mxu0 0.0
    %478 = vmatprep.subr.mxu0 0.0
    %479 = vmatpush1.msra.mxu0 0.0
    %480 = vmatprep.subr.mxu0 0.0
    %481 = vmatpush1.msra.mxu0 0.0
    %482 = vmatprep.subr.mxu0 0.0
    %483 = vmatpush1.msra.mxu0 0.0
    %484 = vmatprep.subr.mxu0 0.0
    %485 = vmatpush1.msra.mxu0 0.0
    %486 = vmatprep.subr.mxu0 0.0
    %487 = vmatpush1.msra.mxu0 0.0
    %488 = vmatprep.subr.mxu0 0.0
    %489 = vmatpush1.msra.mxu0 0.0
    %490 = vmatprep.subr.mxu0 0.0
    %491 = vmatpush1.msra.mxu0 0.0
    %492 = vmatprep.subr.mxu0 0.0
    %493 = vmatpush1.msra.mxu0 0.0
    %494 = vmatprep.subr.mxu0 0.0
    %495 = vmatpush1.msra.mxu0 0.0
    %496 = vmatprep.subr.mxu0 0.0
    %497 = vmatpush1.msra.mxu0 0.0
    %498 = vmatprep.subr.mxu0 0.0
    %499 = vmatpush1.msra.mxu0 0.0
    %500 = vmatprep.subr.mxu0 0.0
    %501 = vmatpush1.msra.mxu0 0.0
    %502 = vmatprep.subr.mxu0 0.0
    %503 = vmatpush1.msra.mxu0 0.0
    %504 = vmatprep.subr.mxu0 0.0
    %505 = vmatpush1.msra.mxu0 0.0
    %506 = vmatprep.subr.mxu0 0.0
    %507 = vmatpush1.msra.mxu0 0.0
    %508 = vmatprep.subr.mxu0 0.0
    %509 = vmatpush1.msra.mxu0 0.0
    %510 = vmatprep.subr.mxu0 0.0
    %511 = vmatpush1.msra.mxu0 0.0
    %512 = vmatprep.subr.mxu0 0.0
    %513 = vmatpush1.msra.mxu0 0.0
    %514 = vmatprep.subr.mxu0 0.0
    %515 = vmatpush1.msra.mxu0 0.0
    %516 = vmatprep.subr.mxu0 0.0
    %517 = vmatpush1.msra.mxu0 0.0
    %518 = vmatprep.subr.mxu0 0.0
    %519 = vmatpush1.msra.mxu0 0.0
    %520 = vmatprep.subr.mxu0 0.0
    %521 = vmatpush1.msra.mxu0 0.0
    %522 = vmatprep.mubr.f32.mxu0 0.0
    %523 = vmatmul.mubr.f32.gmra.mrb[0].mxu0 %v314
    %v524 = vpop.f32.mrb[0].mxu0
    %v525 = vadd.f32 0.0, %v524
    %v526 = vpop.f32.mrb[0].mxu0
    %v527 = vadd.f32 0.0, %v526
    %528 = vdwg.mxu0
    %v530 = vlaneseq
    %v531 = vshrl.u32 %v530, 7
    %v532 = vsub.s32 0, %v531
    %v533 = vrot.slane %v42, %v532
    %v534 = vlaneseq
    %v535 = vshrl.u32 %v534, 7
    %v536 = vsub.s32 1, %v535
    %v537 = vrot.slane %v42, %v536
    %v538 = vlaneseq
    %v539 = vshrl.u32 %v538, 7
    %v540 = vsub.s32 2, %v539
    %v541 = vrot.slane %v42, %v540
    %v542 = vlaneseq
    %v543 = vshrl.u32 %v542, 7
    %v544 = vsub.s32 3, %v543
    %v545 = vrot.slane %v42, %v544
    %v546 = vlaneseq
    %v547 = vshrl.u32 %v546, 7
    %v548 = vsub.s32 4, %v547
    %v549 = vrot.slane %v42, %v548
    %v550 = vlaneseq
    %v551 = vshrl.u32 %v550, 7
    %v552 = vsub.s32 5, %v551
    %v553 = vrot.slane %v42, %v552
    %v560 = vmul.f32 %v383, %v533
    %v561 = vmul.f32 %v385, %v537
    %v562 = vmul.f32 %v454, %v541
    %v563 = vmul.f32 %v456, %v545
    %v564 = vmul.f32 %v525, %v549
    %v565 = vmul.f32 %v527, %v553
    %v566 = vadd.f32 %v560, %v561
    %v567 = vadd.f32 %v566, %v562
    %v568 = vadd.f32 %v567, %v563
    %v569 = vadd.f32 %v568, %v564
    %v570 = vadd.f32 %v569, %v565
    %571 = vadd.xlane.f32.xlu0 %v570
    %v572 = vpop.xlane.xlu0 %571
    %v573 = vmul.f32 %v560, %v383
    %v574 = vmul.f32 %v561, %v385
    %v575 = vmul.f32 %v562, %v454
    %v576 = vmul.f32 %v563, %v456
    %v577 = vmul.f32 %v564, %v525
    %v578 = vmul.f32 %v565, %v527
    %v579 = vadd.f32 %v573, %v574
    %v580 = vadd.f32 %v579, %v575
    %v581 = vadd.f32 %v580, %v576
    %v582 = vadd.f32 %v581, %v577
    %v583 = vadd.f32 %v582, %v578
    %584 = vadd.xlane.f32.xlu0 %v583
    %v585 = vpop.xlane.xlu0 %584
    %v586 = vmul.f32 %v572, 0.001953125
    %v587 = vmul.f32 %v585, 0.001953125
    %v588 = vmul.f32 %v586, %v586
    %v589 = vsub.f32 %v587, %v588
    %v590 = vmax.f32 %v589, 0.0
    %v591 = vld [vmem:[%s3] sm:$0xff]
    %v592 = vadd.f32 %v590, 1e-05
    %v593 = vrsqrt.pop %v592
    %v594 = vmul.f32 %v591, %v593
    %v595 = vld [vmem:[%s4] sm:$0xff]
    %v596 = vmul.f32 %v586, %v594
    %v597 = vsub.f32 %v595, %v596
    %599 = vset.pattern.permute.xlu0 0
    %600 = vperm.xlu0 %599, %v594
    %v601 = vpop.permute.xlu0 %600
    %v603 = vmul.f32 %v383, %v601
    %v604 = vmul.f32 %v385, %v601
    %v605 = vmul.f32 %v454, %v601
    %v606 = vmul.f32 %v456, %v601
    %v607 = vmul.f32 %v525, %v601
    %v608 = vmul.f32 %v527, %v601
    %610 = vset.pattern.permute.xlu0 0
    %611 = vperm.xlu0 %610, %v597
    %v612 = vpop.permute.xlu0 %611
    %v614 = vadd.f32 %v603, %v612
    %v615 = vadd.f32 %v604, %v612
    %v616 = vadd.f32 %v605, %v612
    %v617 = vadd.f32 %v606, %v612
    %v618 = vadd.f32 %v607, %v612
    %v619 = vadd.f32 %v608, %v612
    %v620 = vmax.f32 %v614, 0.0
    %v621 = vmax.f32 %v615, 0.0
    %v622 = vmax.f32 %v616, 0.0
    %v623 = vmax.f32 %v617, 0.0
    %v624 = vmax.f32 %v618, 0.0
    %v625 = vmax.f32 %v619, 0.0
    %v626 = vmul.f32 %v620, %v533
    %v627 = vmul.f32 %v621, %v537
    %v628 = vmul.f32 %v622, %v541
    %v629 = vmul.f32 %v623, %v545
    %v630 = vmul.f32 %v624, %v549
    %v631 = vmul.f32 %v625, %v553
    %632 = vrot.lane.b32.xlu0 %v626, 19
    %v633 = vpop.permute.xlu0 %632
    %634 = vrot.lane.b32.xlu0 %v627, 19
    %v635 = vpop.permute.xlu0 %634
    %636 = vrot.lane.b32.xlu0 %v628, 19
    %v637 = vpop.permute.xlu0 %636
    %638 = vrot.lane.b32.xlu0 %v629, 19
    %v639 = vpop.permute.xlu0 %638
    %640 = vrot.lane.b32.xlu0 %v630, 19
    %v641 = vpop.permute.xlu0 %640
    %642 = vrot.lane.b32.xlu0 %v631, 19
    %v643 = vpop.permute.xlu0 %642
    %v644 = vsel %vm63, %v641, %v643
    %v645 = vsel %vm63, %v639, %v641
    %v646 = vsel %vm63, %v637, %v639
    %v647 = vsel %vm63, %v635, %v637
    %v648 = vsel %vm63, %v633, %v635
    %v649 = vsel %vm63, %v643, %v633
    %650 = vst [vmem:[#allocation2] sm:$0xff] %v649
    %651 = vst [vmem:[#allocation2 + $0x8] sm:$0xff] %v648
    %652 = vst [vmem:[#allocation2 + $0x10] sm:$0xff] %v647
    %653 = vst [vmem:[#allocation2 + $0x18] sm:$0xff] %v646
    %654 = vst [vmem:[#allocation2 + $0x20] sm:$0xff] %v645
    %655 = vst [vmem:[#allocation2 + $0x28] sm:$0xff] %v644
    %656 = vrot.lane.b32.xlu0 %v626, 18
    %v657 = vpop.permute.xlu0 %656
    %658 = vrot.lane.b32.xlu0 %v627, 18
    %v659 = vpop.permute.xlu0 %658
    %660 = vrot.lane.b32.xlu0 %v628, 18
    %v661 = vpop.permute.xlu0 %660
    %662 = vrot.lane.b32.xlu0 %v629, 18
    %v663 = vpop.permute.xlu0 %662
    %664 = vrot.lane.b32.xlu0 %v630, 18
    %v665 = vpop.permute.xlu0 %664
    %666 = vrot.lane.b32.xlu0 %v631, 18
    %v667 = vpop.permute.xlu0 %666
    %v668 = vsel %vm88, %v665, %v667
    %v669 = vsel %vm88, %v663, %v665
    %v670 = vsel %vm88, %v661, %v663
    %v671 = vsel %vm88, %v659, %v661
    %v672 = vsel %vm88, %v657, %v659
    %v673 = vsel %vm88, %v667, %v657
    %674 = vst [vmem:[#allocation2 + $0x30] sm:$0xff] %v673
    %675 = vst [vmem:[#allocation2 + $0x38] sm:$0xff] %v672
    %676 = vst [vmem:[#allocation2 + $0x40] sm:$0xff] %v671
    %677 = vst [vmem:[#allocation2 + $0x48] sm:$0xff] %v670
    %678 = vst [vmem:[#allocation2 + $0x50] sm:$0xff] %v669
    %679 = vst [vmem:[#allocation2 + $0x58] sm:$0xff] %v668
    %680 = vrot.lane.b32.xlu0 %v626, 17
    %v681 = vpop.permute.xlu0 %680
    %682 = vrot.lane.b32.xlu0 %v627, 17
    %v683 = vpop.permute.xlu0 %682
    %684 = vrot.lane.b32.xlu0 %v628, 17
    %v685 = vpop.permute.xlu0 %684
    %686 = vrot.lane.b32.xlu0 %v629, 17
    %v687 = vpop.permute.xlu0 %686
    %688 = vrot.lane.b32.xlu0 %v630, 17
    %v689 = vpop.permute.xlu0 %688
    %690 = vrot.lane.b32.xlu0 %v631, 17
    %v691 = vpop.permute.xlu0 %690
    %v692 = vsel %vm113, %v689, %v691
    %v693 = vsel %vm113, %v687, %v689
    %v694 = vsel %vm113, %v685, %v687
    %v695 = vsel %vm113, %v683, %v685
    %v696 = vsel %vm113, %v681, %v683
    %v697 = vsel %vm113, %v691, %v681
    %698 = vst [vmem:[#allocation2 + $0x60] sm:$0xff] %v697
    %699 = vst [vmem:[#allocation2 + $0x68] sm:$0xff] %v696
    %700 = vst [vmem:[#allocation2 + $0x70] sm:$0xff] %v695
    %701 = vst [vmem:[#allocation2 + $0x78] sm:$0xff] %v694
    %702 = vst [vmem:[#allocation2 + $0x80] sm:$0xff] %v693
    %703 = vst [vmem:[#allocation2 + $0x88] sm:$0xff] %v692
    %704 = vrot.lane.b32.xlu0 %v626, 1
    %v705 = vpop.permute.xlu0 %704
    %706 = vrot.lane.b32.xlu0 %v627, 1
    %v707 = vpop.permute.xlu0 %706
    %708 = vrot.lane.b32.xlu0 %v628, 1
    %v709 = vpop.permute.xlu0 %708
    %710 = vrot.lane.b32.xlu0 %v629, 1
    %v711 = vpop.permute.xlu0 %710
    %712 = vrot.lane.b32.xlu0 %v630, 1
    %v713 = vpop.permute.xlu0 %712
    %714 = vrot.lane.b32.xlu0 %v631, 1
    %v715 = vpop.permute.xlu0 %714
    %v716 = vsel %vm138, %v713, %v715
    %v717 = vsel %vm138, %v711, %v713
    %v718 = vsel %vm138, %v709, %v711
    %v719 = vsel %vm138, %v707, %v709
    %v720 = vsel %vm138, %v705, %v707
    %v721 = vsel %vm138, %v715, %v705
    %722 = vst [vmem:[#allocation2 + $0x90] sm:$0xff] %v721
    %723 = vst [vmem:[#allocation2 + $0x98] sm:$0xff] %v720
    %724 = vst [vmem:[#allocation2 + $0xa0] sm:$0xff] %v719
    %725 = vst [vmem:[#allocation2 + $0xa8] sm:$0xff] %v718
    %726 = vst [vmem:[#allocation2 + $0xb0] sm:$0xff] %v717
    %727 = vst [vmem:[#allocation2 + $0xb8] sm:$0xff] %v716
    %728 = vst [vmem:[#allocation2 + $0xc0] sm:$0xff] %v626
    %729 = vst [vmem:[#allocation2 + $0xc8] sm:$0xff] %v627
    %730 = vst [vmem:[#allocation2 + $0xd0] sm:$0xff] %v628
    %731 = vst [vmem:[#allocation2 + $0xd8] sm:$0xff] %v629
    %732 = vst [vmem:[#allocation2 + $0xe0] sm:$0xff] %v630
    %733 = vst [vmem:[#allocation2 + $0xe8] sm:$0xff] %v631
    %734 = vrot.lane.b32.xlu0 %v626, 127
    %v735 = vpop.permute.xlu0 %734
    %736 = vrot.lane.b32.xlu0 %v627, 127
    %v737 = vpop.permute.xlu0 %736
    %738 = vrot.lane.b32.xlu0 %v628, 127
    %v739 = vpop.permute.xlu0 %738
    %740 = vrot.lane.b32.xlu0 %v629, 127
    %v741 = vpop.permute.xlu0 %740
    %742 = vrot.lane.b32.xlu0 %v630, 127
    %v743 = vpop.permute.xlu0 %742
    %744 = vrot.lane.b32.xlu0 %v631, 127
    %v745 = vpop.permute.xlu0 %744
    %v746 = vsel %vm169, %v743, %v745
    %v747 = vsel %vm169, %v741, %v743
    %v748 = vsel %vm169, %v739, %v741
    %v749 = vsel %vm169, %v737, %v739
    %v750 = vsel %vm169, %v735, %v737
    %v751 = vsel %vm169, %v745, %v735
    %752 = vst [vmem:[#allocation2 + $0xf0] sm:$0xff] %v750
    %753 = vst [vmem:[#allocation2 + $0xf8] sm:$0xff] %v749
    %754 = vst [vmem:[#allocation2 + $0x100] sm:$0xff] %v748
    %755 = vst [vmem:[#allocation2 + $0x108] sm:$0xff] %v747
    %756 = vst [vmem:[#allocation2 + $0x110] sm:$0xff] %v746
    %757 = vst [vmem:[#allocation2 + $0x118] sm:$0xff] %v751
    %758 = vrot.lane.b32.xlu0 %v626, 111
    %v759 = vpop.permute.xlu0 %758
    %760 = vrot.lane.b32.xlu0 %v627, 111
    %v761 = vpop.permute.xlu0 %760
    %762 = vrot.lane.b32.xlu0 %v628, 111
    %v763 = vpop.permute.xlu0 %762
    %764 = vrot.lane.b32.xlu0 %v629, 111
    %v765 = vpop.permute.xlu0 %764
    %766 = vrot.lane.b32.xlu0 %v630, 111
    %v767 = vpop.permute.xlu0 %766
    %768 = vrot.lane.b32.xlu0 %v631, 111
    %v769 = vpop.permute.xlu0 %768
    %v770 = vsel %vm194, %v767, %v769
    %v771 = vsel %vm194, %v765, %v767
    %v772 = vsel %vm194, %v763, %v765
    %v773 = vsel %vm194, %v761, %v763
    %v774 = vsel %vm194, %v759, %v761
    %v775 = vsel %vm194, %v769, %v759
    %776 = vst [vmem:[#allocation2 + $0x120] sm:$0xff] %v774
    %777 = vst [vmem:[#allocation2 + $0x128] sm:$0xff] %v773
    %778 = vst [vmem:[#allocation2 + $0x130] sm:$0xff] %v772
    %779 = vst [vmem:[#allocation2 + $0x138] sm:$0xff] %v771
    %780 = vst [vmem:[#allocation2 + $0x140] sm:$0xff] %v770
    %781 = vst [vmem:[#allocation2 + $0x148] sm:$0xff] %v775
    %782 = vrot.lane.b32.xlu0 %v626, 110
    %v783 = vpop.permute.xlu0 %782
    %784 = vrot.lane.b32.xlu0 %v627, 110
    %v785 = vpop.permute.xlu0 %784
    %786 = vrot.lane.b32.xlu0 %v628, 110
    %v787 = vpop.permute.xlu0 %786
    %788 = vrot.lane.b32.xlu0 %v629, 110
    %v789 = vpop.permute.xlu0 %788
    %790 = vrot.lane.b32.xlu0 %v630, 110
    %v791 = vpop.permute.xlu0 %790
    %792 = vrot.lane.b32.xlu0 %v631, 110
    %v793 = vpop.permute.xlu0 %792
    %v794 = vsel %vm219, %v791, %v793
    %v795 = vsel %vm219, %v789, %v791
    %v796 = vsel %vm219, %v787, %v789
    %v797 = vsel %vm219, %v785, %v787
    %v798 = vsel %vm219, %v783, %v785
    %v799 = vsel %vm219, %v793, %v783
    %800 = vst [vmem:[#allocation2 + $0x150] sm:$0xff] %v798
    %801 = vst [vmem:[#allocation2 + $0x158] sm:$0xff] %v797
    %802 = vst [vmem:[#allocation2 + $0x160] sm:$0xff] %v796
    %803 = vst [vmem:[#allocation2 + $0x168] sm:$0xff] %v795
    %804 = vst [vmem:[#allocation2 + $0x170] sm:$0xff] %v794
    %805 = vst [vmem:[#allocation2 + $0x178] sm:$0xff] %v799
    %806 = vrot.lane.b32.xlu0 %v626, 109
    %v807 = vpop.permute.xlu0 %806
    %808 = vrot.lane.b32.xlu0 %v627, 109
    %v809 = vpop.permute.xlu0 %808
    %810 = vrot.lane.b32.xlu0 %v628, 109
    %v811 = vpop.permute.xlu0 %810
    %812 = vrot.lane.b32.xlu0 %v629, 109
    %v813 = vpop.permute.xlu0 %812
    %814 = vrot.lane.b32.xlu0 %v630, 109
    %v815 = vpop.permute.xlu0 %814
    %816 = vrot.lane.b32.xlu0 %v631, 109
    %v817 = vpop.permute.xlu0 %816
    %v818 = vsel %vm244, %v815, %v817
    %v819 = vsel %vm244, %v813, %v815
    %v820 = vsel %vm244, %v811, %v813
    %v821 = vsel %vm244, %v809, %v811
    %v822 = vsel %vm244, %v807, %v809
    %v823 = vsel %vm244, %v817, %v807
    %824 = vst [vmem:[#allocation2 + $0x180] sm:$0xff] %v822
    %825 = vst [vmem:[#allocation2 + $0x188] sm:$0xff] %v821
    %826 = vst [vmem:[#allocation2 + $0x190] sm:$0xff] %v820
    %827 = vst [vmem:[#allocation2 + $0x198] sm:$0xff] %v819
    %828 = vst [vmem:[#allocation2 + $0x1a0] sm:$0xff] %v818
    %829 = vst [vmem:[#allocation2 + $0x1a8] sm:$0xff] %v823
    %v830 = vld [vmem:[%s5] sm:$0xff]
    %v831 = vld [vmem:[#allocation2] sm:$0xff]
    %v832 = vld [vmem:[#allocation2 + $0x8] sm:$0xff]
    %v833 = vld [vmem:[#allocation2 + $0x10] sm:$0xff]
    %v834 = vld [vmem:[#allocation2 + $0x18] sm:$0xff]
    %v835 = vld [vmem:[#allocation2 + $0x20] sm:$0xff]
    %v836 = vld [vmem:[#allocation2 + $0x28] sm:$0xff]
    %v837 = vld [vmem:[#allocation2 + $0x30] sm:$0xff]
    %v838 = vld [vmem:[#allocation2 + $0x38] sm:$0xff]
    %v839 = vld [vmem:[#allocation2 + $0x40] sm:$0xff]
    %v840 = vld [vmem:[#allocation2 + $0x48] sm:$0xff]
    %v841 = vld [vmem:[#allocation2 + $0x50] sm:$0xff]
    %v842 = vld [vmem:[#allocation2 + $0x58] sm:$0xff]
    %v843 = vld [vmem:[#allocation2 + $0x60] sm:$0xff]
    %v844 = vld [vmem:[#allocation2 + $0x68] sm:$0xff]
    %v845 = vld [vmem:[#allocation2 + $0x70] sm:$0xff]
    %v846 = vld [vmem:[#allocation2 + $0x78] sm:$0xff]
    %v847 = vld [vmem:[#allocation2 + $0x80] sm:$0xff]
    %v848 = vld [vmem:[#allocation2 + $0x88] sm:$0xff]
    %v849 = vld [vmem:[#allocation2 + $0x90] sm:$0xff]
    %v850 = vld [vmem:[#allocation2 + $0x98] sm:$0xff]
    %v851 = vld [vmem:[#allocation2 + $0xa0] sm:$0xff]
    %v852 = vld [vmem:[#allocation2 + $0xa8] sm:$0xff]
    %v853 = vld [vmem:[#allocation2 + $0xb0] sm:$0xff]
    %v854 = vld [vmem:[#allocation2 + $0xb8] sm:$0xff]
    %v855 = vld [vmem:[#allocation2 + $0xc0] sm:$0xff]
    %v856 = vld [vmem:[#allocation2 + $0xc8] sm:$0xff]
    %v857 = vld [vmem:[#allocation2 + $0xd0] sm:$0xff]
    %v858 = vld [vmem:[#allocation2 + $0xd8] sm:$0xff]
    %v859 = vld [vmem:[#allocation2 + $0xe0] sm:$0xff]
    %v860 = vld [vmem:[#allocation2 + $0xe8] sm:$0xff]
    %v861 = vld [vmem:[#allocation2 + $0xf0] sm:$0xff]
    %v862 = vld [vmem:[#allocation2 + $0xf8] sm:$0xff]
    %v863 = vld [vmem:[#allocation2 + $0x100] sm:$0xff]
    %v864 = vld [vmem:[#allocation2 + $0x108] sm:$0xff]
    %v865 = vld [vmem:[#allocation2 + $0x110] sm:$0xff]
    %v866 = vld [vmem:[#allocation2 + $0x118] sm:$0xff]
    %v867 = vld [vmem:[#allocation2 + $0x120] sm:$0xff]
    %v868 = vld [vmem:[#allocation2 + $0x128] sm:$0xff]
    %v869 = vld [vmem:[#allocation2 + $0x130] sm:$0xff]
    %v870 = vld [vmem:[#allocation2 + $0x138] sm:$0xff]
    %v871 = vld [vmem:[#allocation2 + $0x140] sm:$0xff]
    %v872 = vld [vmem:[#allocation2 + $0x148] sm:$0xff]
    %v873 = vld [vmem:[#allocation2 + $0x150] sm:$0xff]
    %v874 = vld [vmem:[#allocation2 + $0x158] sm:$0xff]
    %v875 = vld [vmem:[#allocation2 + $0x160] sm:$0xff]
    %v876 = vld [vmem:[#allocation2 + $0x168] sm:$0xff]
    %v877 = vld [vmem:[#allocation2 + $0x170] sm:$0xff]
    %v878 = vld [vmem:[#allocation2 + $0x178] sm:$0xff]
    %v879 = vld [vmem:[#allocation2 + $0x180] sm:$0xff]
    %v880 = vld [vmem:[#allocation2 + $0x188] sm:$0xff]
    %v881 = vld [vmem:[#allocation2 + $0x190] sm:$0xff]
    %v882 = vld [vmem:[#allocation2 + $0x198] sm:$0xff]
    %v883 = vld [vmem:[#allocation2 + $0x1a0] sm:$0xff]
    %v884 = vld [vmem:[#allocation2 + $0x1a8] sm:$0xff]
    %v886 = vsel %vm312, %v830, 0
    %888 = vmatprep.subr.mxu0 %v832
    %889 = vmatpush1.msra.mxu0 %v831
    %890 = vmatprep.subr.mxu0 %v838
    %891 = vmatpush1.msra.mxu0 %v837
    %892 = vmatprep.subr.mxu0 %v844
    %893 = vmatpush1.msra.mxu0 %v843
    %894 = vmatprep.subr.mxu0 %v850
    %895 = vmatpush1.msra.mxu0 %v849
    %896 = vmatprep.subr.mxu0 %v856
    %897 = vmatpush1.msra.mxu0 %v855
    %898 = vmatprep.subr.mxu0 %v862
    %899 = vmatpush1.msra.mxu0 %v861
    %900 = vmatprep.subr.mxu0 %v868
    %901 = vmatpush1.msra.mxu0 %v867
    %902 = vmatprep.subr.mxu0 %v874
    %903 = vmatpush1.msra.mxu0 %v873
    %904 = vmatprep.subr.mxu0 %v880
    %905 = vmatpush1.msra.mxu0 %v879
    %906 = vmatprep.subr.mxu0 0.0
    %907 = vmatpush1.msra.mxu0 0.0
    %908 = vmatprep.subr.mxu0 0.0
    %909 = vmatpush1.msra.mxu0 0.0
    %910 = vmatprep.subr.mxu0 0.0
    %911 = vmatpush1.msra.mxu0 0.0
    %912 = vmatprep.subr.mxu0 0.0
    %913 = vmatpush1.msra.mxu0 0.0
    %914 = vmatprep.subr.mxu0 0.0
    %915 = vmatpush1.msra.mxu0 0.0
    %916 = vmatprep.subr.mxu0 0.0
    %917 = vmatpush1.msra.mxu0 0.0
    %918 = vmatprep.subr.mxu0 0.0
    %919 = vmatpush1.msra.mxu0 0.0
    %920 = vmatprep.subr.mxu0 0.0
    %921 = vmatpush1.msra.mxu0 0.0
    %922 = vmatprep.subr.mxu0 0.0
    %923 = vmatpush1.msra.mxu0 0.0
    %924 = vmatprep.subr.mxu0 0.0
    %925 = vmatpush1.msra.mxu0 0.0
    %926 = vmatprep.subr.mxu0 0.0
    %927 = vmatpush1.msra.mxu0 0.0
    %928 = vmatprep.subr.mxu0 0.0
    %929 = vmatpush1.msra.mxu0 0.0
    %930 = vmatprep.subr.mxu0 0.0
    %931 = vmatpush1.msra.mxu0 0.0
    %932 = vmatprep.subr.mxu0 0.0
    %933 = vmatpush1.msra.mxu0 0.0
    %934 = vmatprep.subr.mxu0 0.0
    %935 = vmatpush1.msra.mxu0 0.0
    %936 = vmatprep.subr.mxu0 0.0
    %937 = vmatpush1.msra.mxu0 0.0
    %938 = vmatprep.subr.mxu0 0.0
    %939 = vmatpush1.msra.mxu0 0.0
    %940 = vmatprep.subr.mxu0 0.0
    %941 = vmatpush1.msra.mxu0 0.0
    %942 = vmatprep.subr.mxu0 0.0
    %943 = vmatpush1.msra.mxu0 0.0
    %944 = vmatprep.subr.mxu0 0.0
    %945 = vmatpush1.msra.mxu0 0.0
    %946 = vmatprep.subr.mxu0 0.0
    %947 = vmatpush1.msra.mxu0 0.0
    %948 = vmatprep.subr.mxu0 0.0
    %949 = vmatpush1.msra.mxu0 0.0
    %950 = vmatprep.subr.mxu0 0.0
    %951 = vmatpush1.msra.mxu0 0.0
    %952 = vmatprep.mubr.f32.mxu0 0.0
    %953 = vmatmul.mubr.f32.gmra.mrb[0].mxu0 %v886
    %v954 = vpop.f32.mrb[0].mxu0
    %v955 = vadd.f32 0.0, %v954
    %v956 = vpop.f32.mrb[0].mxu0
    %v957 = vadd.f32 0.0, %v956
    %958 = vdwg.mxu0
    %959 = vmatprep.subr.mxu0 %v834
    %960 = vmatpush1.msra.mxu0 %v833
    %961 = vmatprep.subr.mxu0 %v840
    %962 = vmatpush1.msra.mxu0 %v839
    %963 = vmatprep.subr.mxu0 %v846
    %964 = vmatpush1.msra.mxu0 %v845
    %965 = vmatprep.subr.mxu0 %v852
    %966 = vmatpush1.msra.mxu0 %v851
    %967 = vmatprep.subr.mxu0 %v858
    %968 = vmatpush1.msra.mxu0 %v857
    %969 = vmatprep.subr.mxu0 %v864
    %970 = vmatpush1.msra.mxu0 %v863
    %971 = vmatprep.subr.mxu0 %v870
    %972 = vmatpush1.msra.mxu0 %v869
    %973 = vmatprep.subr.mxu0 %v876
    %974 = vmatpush1.msra.mxu0 %v875
    %975 = vmatprep.subr.mxu0 %v882
    %976 = vmatpush1.msra.mxu0 %v881
    %977 = vmatprep.subr.mxu0 0.0
    %978 = vmatpush1.msra.mxu0 0.0
    %979 = vmatprep.subr.mxu0 0.0
    %980 = vmatpush1.msra.mxu0 0.0
    %981 = vmatprep.subr.mxu0 0.0
    %982 = vmatpush1.msra.mxu0 0.0
    %983 = vmatprep.subr.mxu0 0.0
    %984 = vmatpush1.msra.mxu0 0.0
    %985 = vmatprep.subr.mxu0 0.0
    %986 = vmatpush1.msra.mxu0 0.0
    %987 = vmatprep.subr.mxu0 0.0
    %988 = vmatpush1.msra.mxu0 0.0
    %989 = vmatprep.subr.mxu0 0.0
    %990 = vmatpush1.msra.mxu0 0.0
    %991 = vmatprep.subr.mxu0 0.0
    %992 = vmatpush1.msra.mxu0 0.0
    %993 = vmatprep.subr.mxu0 0.0
    %994 = vmatpush1.msra.mxu0 0.0
    %995 = vmatprep.subr.mxu0 0.0
    %996 = vmatpush1.msra.mxu0 0.0
    %997 = vmatprep.subr.mxu0 0.0
    %998 = vmatpush1.msra.mxu0 0.0
    %999 = vmatprep.subr.mxu0 0.0
    %1000 = vmatpush1.msra.mxu0 0.0
    %1001 = vmatprep.subr.mxu0 0.0
    %1002 = vmatpush1.msra.mxu0 0.0
    %1003 = vmatprep.subr.mxu0 0.0
    %1004 = vmatpush1.msra.mxu0 0.0
    %1005 = vmatprep.subr.mxu0 0.0
    %1006 = vmatpush1.msra.mxu0 0.0
    %1007 = vmatprep.subr.mxu0 0.0
    %1008 = vmatpush1.msra.mxu0 0.0
    %1009 = vmatprep.subr.mxu0 0.0
    %1010 = vmatpush1.msra.mxu0 0.0
    %1011 = vmatprep.subr.mxu0 0.0
    %1012 = vmatpush1.msra.mxu0 0.0
    %1013 = vmatprep.subr.mxu0 0.0
    %1014 = vmatpush1.msra.mxu0 0.0
    %1015 = vmatprep.subr.mxu0 0.0
    %1016 = vmatpush1.msra.mxu0 0.0
    %1017 = vmatprep.subr.mxu0 0.0
    %1018 = vmatpush1.msra.mxu0 0.0
    %1019 = vmatprep.subr.mxu0 0.0
    %1020 = vmatpush1.msra.mxu0 0.0
    %1021 = vmatprep.subr.mxu0 0.0
    %1022 = vmatpush1.msra.mxu0 0.0
    %1023 = vmatprep.mubr.f32.mxu0 0.0
    %1024 = vmatmul.mubr.f32.gmra.mrb[0].mxu0 %v886
    %v1025 = vpop.f32.mrb[0].mxu0
    %v1026 = vadd.f32 0.0, %v1025
    %v1027 = vpop.f32.mrb[0].mxu0
    %v1028 = vadd.f32 0.0, %v1027
    %1029 = vdwg.mxu0
    %1030 = vmatprep.subr.mxu0 %v836
    %1031 = vmatpush1.msra.mxu0 %v835
    %1032 = vmatprep.subr.mxu0 %v842
    %1033 = vmatpush1.msra.mxu0 %v841
    %1034 = vmatprep.subr.mxu0 %v848
    %1035 = vmatpush1.msra.mxu0 %v847
    %1036 = vmatprep.subr.mxu0 %v854
    %1037 = vmatpush1.msra.mxu0 %v853
    %1038 = vmatprep.subr.mxu0 %v860
    %1039 = vmatpush1.msra.mxu0 %v859
    %1040 = vmatprep.subr.mxu0 %v866
    %1041 = vmatpush1.msra.mxu0 %v865
    %1042 = vmatprep.subr.mxu0 %v872
    %1043 = vmatpush1.msra.mxu0 %v871
    %1044 = vmatprep.subr.mxu0 %v878
    %1045 = vmatpush1.msra.mxu0 %v877
    %1046 = vmatprep.subr.mxu0 %v884
    %1047 = vmatpush1.msra.mxu0 %v883
    %1048 = vmatprep.subr.mxu0 0.0
    %1049 = vmatpush1.msra.mxu0 0.0
    %1050 = vmatprep.subr.mxu0 0.0
    %1051 = vmatpush1.msra.mxu0 0.0
    %1052 = vmatprep.subr.mxu0 0.0
    %1053 = vmatpush1.msra.mxu0 0.0
    %1054 = vmatprep.subr.mxu0 0.0
    %1055 = vmatpush1.msra.mxu0 0.0
    %1056 = vmatprep.subr.mxu0 0.0
    %1057 = vmatpush1.msra.mxu0 0.0
    %1058 = vmatprep.subr.mxu0 0.0
    %1059 = vmatpush1.msra.mxu0 0.0
    %1060 = vmatprep.subr.mxu0 0.0
    %1061 = vmatpush1.msra.mxu0 0.0
    %1062 = vmatprep.subr.mxu0 0.0
    %1063 = vmatpush1.msra.mxu0 0.0
    %1064 = vmatprep.subr.mxu0 0.0
    %1065 = vmatpush1.msra.mxu0 0.0
    %1066 = vmatprep.subr.mxu0 0.0
    %1067 = vmatpush1.msra.mxu0 0.0
    %1068 = vmatprep.subr.mxu0 0.0
    %1069 = vmatpush1.msra.mxu0 0.0
    %1070 = vmatprep.subr.mxu0 0.0
    %1071 = vmatpush1.msra.mxu0 0.0
    %1072 = vmatprep.subr.mxu0 0.0
    %1073 = vmatpush1.msra.mxu0 0.0
    %1074 = vmatprep.subr.mxu0 0.0
    %1075 = vmatpush1.msra.mxu0 0.0
    %1076 = vmatprep.subr.mxu0 0.0
    %1077 = vmatpush1.msra.mxu0 0.0
    %1078 = vmatprep.subr.mxu0 0.0
    %1079 = vmatpush1.msra.mxu0 0.0
    %1080 = vmatprep.subr.mxu0 0.0
    %1081 = vmatpush1.msra.mxu0 0.0
    %1082 = vmatprep.subr.mxu0 0.0
    %1083 = vmatpush1.msra.mxu0 0.0
    %1084 = vmatprep.subr.mxu0 0.0
    %1085 = vmatpush1.msra.mxu0 0.0
    %1086 = vmatprep.subr.mxu0 0.0
    %1087 = vmatpush1.msra.mxu0 0.0
    %1088 = vmatprep.subr.mxu0 0.0
    %1089 = vmatpush1.msra.mxu0 0.0
    %1090 = vmatprep.subr.mxu0 0.0
    %1091 = vmatpush1.msra.mxu0 0.0
    %1092 = vmatprep.subr.mxu0 0.0
    %1093 = vmatpush1.msra.mxu0 0.0
    %1094 = vmatprep.mubr.f32.mxu0 0.0
    %1095 = vmatmul.mubr.f32.gmra.mrb[0].mxu0 %v886
    %v1096 = vpop.f32.mrb[0].mxu0
    %v1097 = vadd.f32 0.0, %v1096
    %v1098 = vpop.f32.mrb[0].mxu0
    %v1099 = vadd.f32 0.0, %v1098
    %1100 = vdwg.mxu0
    %v1101 = vmul.f32 %v955, %v533
    %v1102 = vmul.f32 %v957, %v537
    %v1103 = vmul.f32 %v1026, %v541
    %v1104 = vmul.f32 %v1028, %v545
    %v1105 = vmul.f32 %v1097, %v549
    %v1106 = vmul.f32 %v1099, %v553
    %v1107 = vadd.f32 %v1101, %v1102
    %v1108 = vadd.f32 %v1107, %v1103
    %v1109 = vadd.f32 %v1108, %v1104
    %v1110 = vadd.f32 %v1109, %v1105
    %v1111 = vadd.f32 %v1110, %v1106
    %1112 = vadd.xlane.f32.xlu0 %v1111
    %v1113 = vpop.xlane.xlu0 %1112
    %v1114 = vmul.f32 %v1101, %v955
    %v1115 = vmul.f32 %v1102, %v957
    %v1116 = vmul.f32 %v1103, %v1026
    %v1117 = vmul.f32 %v1104, %v1028
    %v1118 = vmul.f32 %v1105, %v1097
    %v1119 = vmul.f32 %v1106, %v1099
    %v1120 = vadd.f32 %v1114, %v1115
    %v1121 = vadd.f32 %v1120, %v1116
    %v1122 = vadd.f32 %v1121, %v1117
    %v1123 = vadd.f32 %v1122, %v1118
    %v1124 = vadd.f32 %v1123, %v1119
    %1125 = vadd.xlane.f32.xlu0 %v1124
    %v1126 = vpop.xlane.xlu0 %1125
    %v1127 = vmul.f32 %v1113, 0.001953125
    %v1128 = vmul.f32 %v1126, 0.001953125
    %v1129 = vmul.f32 %v1127, %v1127
    %v1130 = vsub.f32 %v1128, %v1129
    %v1131 = vmax.f32 %v1130, 0.0
    %v1132 = vld [vmem:[%s6] sm:$0xff]
    %v1133 = vadd.f32 %v1131, 1e-05
    %v1134 = vrsqrt.pop %v1133
    %v1135 = vmul.f32 %v1132, %v1134
    %v1136 = vld [vmem:[%s7] sm:$0xff]
    %v1137 = vmul.f32 %v1127, %v1135
    %v1138 = vsub.f32 %v1136, %v1137
    %1140 = vset.pattern.permute.xlu0 0
    %1141 = vperm.xlu0 %1140, %v1135
    %v1142 = vpop.permute.xlu0 %1141
    %v1144 = vmul.f32 %v955, %v1142
    %v1145 = vmul.f32 %v957, %v1142
    %v1146 = vmul.f32 %v1026, %v1142
    %v1147 = vmul.f32 %v1028, %v1142
    %v1148 = vmul.f32 %v1097, %v1142
    %v1149 = vmul.f32 %v1099, %v1142
    %1151 = vset.pattern.permute.xlu0 0
    %1152 = vperm.xlu0 %1151, %v1138
    %v1153 = vpop.permute.xlu0 %1152
    %v1155 = vadd.f32 %v1144, %v1153
    %v1156 = vadd.f32 %v1145, %v1153
    %v1157 = vadd.f32 %v1146, %v1153
    %v1158 = vadd.f32 %v1147, %v1153
    %v1159 = vadd.f32 %v1148, %v1153
    %v1160 = vadd.f32 %v1149, %v1153
    %v1161 = vmax.f32 %v1155, 0.0
    %v1162 = vmax.f32 %v1156, 0.0
    %v1163 = vmax.f32 %v1157, 0.0
    %v1164 = vmax.f32 %v1158, 0.0
    %v1165 = vmax.f32 %v1159, 0.0
    %v1166 = vmax.f32 %v1160, 0.0
    %v1167 = vmul.f32 %v1161, %v533
    %v1168 = vmul.f32 %v1162, %v537
    %v1169 = vmul.f32 %v1163, %v541
    %v1170 = vmul.f32 %v1164, %v545
    %v1171 = vmul.f32 %v1165, %v549
    %v1172 = vmul.f32 %v1166, %v553
    %1173 = vst [vmem:[#allocation6] sm:$0xff] %v1167
    %1174 = vst [vmem:[#allocation6 + $0x8] sm:$0xff] %v1168
    %1175 = vst [vmem:[#allocation6 + $0x10] sm:$0xff] %v1169
    %1176 = vst [vmem:[#allocation6 + $0x18] sm:$0xff] %v1170
    %1177 = vst [vmem:[#allocation6 + $0x20] sm:$0xff] %v1171
    %1178 = vst [vmem:[#allocation6 + $0x28] sm:$0xff] %v1172
    // Predicated region
    $region38: #{tpu_custom_call.1} parent=1 // pred_check
      _
    $region39: #{tpu_custom_call.1} parent=1 // pred_check_branch
      %1180 = sbr.rel (0) target = $region41
    $region40: #{tpu_custom_call.1} parent=1 // pred_region
      %s1182 = ssub.s32 768, 768
      %1183 = vsyncadd [#allocation5], %s1182
      %s1185 = sshll.u32 [#allocation6], 4
      %s1186 = int_to_ptr.vmem [resolvable:$true] %s1185
      %1188 = dma.vmem_to_hbm [thread:$0]  %s1186, 768, %s8, [#allocation5]
    $region41: #{tpu_custom_call.1} parent=1 // pred_fallthru
      _
    // Predicated region
    $region42: #{tpu_custom_call.1} parent=1 // pred_check
      _
    $region43: #{tpu_custom_call.1} parent=1 // pred_check_branch
      %1190 = sbr.rel (0) target = $region45
    $region44: #{tpu_custom_call.1} parent=1 // pred_region
      %1191 = dma.done [#allocation5], 768
    $region45: #{tpu_custom_call.1} parent=1 // pred_fallthru
      _
    %1192 = vsyncpa [#allocation4], 1
    %1193 = vsyncpa [#allocation5], 1

</llo_original>
